<compile_context>
chip_gen: v5e
topology: v5e:2x2
jax: 0.10.0
libtpu: 0.0.40
codegen_flags: <defaults>
</compile_context>

<pallas_src>
import jax
import jax.numpy as jnp
from jax.experimental import pallas as pl
from jax.experimental.pallas import tpu as pltpu

EMB_DIM = 512
HIDDEN_DIM = 512


def _sentinel_kernel(x_ref, h_ref, m_ref, wx_ref, wh_ref, o_ref):
    """One batch tile: s_t = sigmoid(x @ W_x + h @ W_h) * tanh(m_t)."""
    wx = wx_ref[...]
    wh = wh_ref[...]
    x = x_ref[...]
    h = h_ref[...]
    # Static (trace-time) dtype checks: no cast is emitted when the caller
    # already provides activations in the weight dtype (preferred path).
    if x.dtype != wx.dtype:
        x = x.astype(wx.dtype)
    if h.dtype != wh.dtype:
        h = h.astype(wh.dtype)
    gate = jnp.dot(x, wx, preferred_element_type=jnp.float32)       # MXU
    gate = gate + jnp.dot(h, wh, preferred_element_type=jnp.float32)  # MXU + VPU add
    g_t = jax.nn.sigmoid(gate)                                       # EUP
    m = m_ref[...]
    if m.dtype != jnp.float32:
        m = m.astype(jnp.float32)
    o_ref[...] = (g_t * jnp.tanh(m)).astype(o_ref.dtype)             # EUP + VPU


def visual_sentinel(x_t, prev_h_t, m_t, w_x, w_h, *, tile_b_max=512):
    """Pallas implementation of VisualSentinel.forward.

    x_t:      [B, HIDDEN_DIM + EMB_DIM]
    prev_h_t: [B, HIDDEN_DIM]
    m_t:      [B, HIDDEN_DIM]
    w_x:      [HIDDEN_DIM + EMB_DIM, HIDDEN_DIM]
    w_h:      [HIDDEN_DIM, HIDDEN_DIM]
    returns:  [B, HIDDEN_DIM] in x_t.dtype
    """
    B, Kx = x_t.shape
    Kh = prev_h_t.shape[1]
    N = w_x.shape[1]
    assert w_x.shape == (Kx, N) and w_h.shape == (Kh, N)
    assert prev_h_t.shape == (B, Kh) and m_t.shape == (B, N)

    out_dtype = x_t.dtype
    act_it = jnp.dtype(x_t.dtype).itemsize
    m_it = jnp.dtype(m_t.dtype).itemsize
    w_it = jnp.dtype(w_x.dtype).itemsize
    out_it = jnp.dtype(out_dtype).itemsize

    # ---- batch tiling: avoid padding whenever possible -------------------
    if B <= tile_b_max:
        # Block row dim == full array dim -> no (8,128) divisibility needed,
        # no jnp.pad, single grid step.
        n_tiles = 1
        tile_b = B
        pad_b = B
    else:
        # Choose the number of tiles first, then a tile size (multiple of 8)
        # so the last tile carries at most 8*n_tiles rows of padding.
        n_tiles = pl.cdiv(B, tile_b_max)
        tile_b = ((pl.cdiv(B, n_tiles) + 7) // 8) * 8
        pad_b = n_tiles * tile_b

    if pad_b != B:
        pad = pad_b - B
        x_t = jnp.pad(x_t, ((0, pad), (0, 0)))
        prev_h_t = jnp.pad(prev_h_t, ((0, pad), (0, 0)))
        m_t = jnp.pad(m_t, ((0, pad), (0, 0)))

    # ---- megacore: only shard batch tiles when activations dominate ------
    w_bytes = (Kx + Kh) * N * w_it
    act_stream_bytes = pad_b * (Kx + Kh) * act_it + pad_b * N * (m_it + out_it)
    use_parallel = (n_tiles > 1) and (act_stream_bytes >= 4 * w_bytes)
    dim_sem = ("parallel",) if use_parallel else ("arbitrary",)

    # ---- scoped VMEM budget (explicit so v5e's 16 MiB default is not a cap)
    vmem_need = (
        2 * tile_b * (Kx * act_it + Kh * act_it + N * m_it)  # double-buffered inputs
        + 2 * tile_b * N * out_it                            # double-buffered output
        + 2 * (Kx + Kh) * N * w_it                           # weights (2 bufs, conservative)
        + 4 * tile_b * N * 4                                 # f32 gate/intermediates headroom
    )
    vmem_limit = int(min(max(vmem_need + (4 << 20), 16 << 20), 64 << 20))

    cost = pl.CostEstimate(
        flops=2 * pad_b * (Kx + Kh) * N,
        transcendentals=3 * pad_b * N,  # sigmoid ~ exp + reciprocal, tanh ~ 1
        bytes_accessed=(
            w_bytes
            + pad_b * (Kx + Kh) * act_it
            + pad_b * N * m_it
            + pad_b * N * out_it
        ),
    )

    out = pl.pallas_call(
        _sentinel_kernel,
        out_shape=jax.ShapeDtypeStruct((pad_b, N), out_dtype),
        grid_spec=pltpu.PrefetchScalarGridSpec(
            num_scalar_prefetch=0,
            grid=(n_tiles,),
            in_specs=[
                pl.BlockSpec((tile_b, Kx), lambda i: (i, 0)),  # x_t rows
                pl.BlockSpec((tile_b, Kh), lambda i: (i, 0)),  # prev_h_t rows
                pl.BlockSpec((tile_b, N), lambda i: (i, 0)),   # m_t rows
                pl.BlockSpec((Kx, N), lambda i: (0, 0)),       # W_x, pinned (re-used)
                pl.BlockSpec((Kh, N), lambda i: (0, 0)),       # W_h, pinned (re-used)
            ],
            out_specs=pl.BlockSpec((tile_b, N), lambda i: (i, 0)),
        ),
        compiler_params=pltpu.CompilerParams(
            dimension_semantics=dim_sem,
            vmem_limit_bytes=vmem_limit,
        ),
        cost_estimate=cost,
    )(x_t, prev_h_t, m_t, w_x, w_h)
    return out[:B]


if __name__ == "__main__":
    key = jax.random.PRNGKey(0)
    k_wx, k_wh, k_x, k_h, k_m = jax.random.split(key, 5)

    # Parameters (torch.randn-like ~ N(0, 1))
    w_x = jax.random.normal(k_wx, (HIDDEN_DIM + EMB_DIM, HIDDEN_DIM), jnp.float32)
    w_h = jax.random.normal(k_wh, (HIDDEN_DIM, HIDDEN_DIM), jnp.float32)

    def reference(x, h, m):
        return jax.nn.sigmoid(x @ w_x + h @ w_h) * jnp.tanh(m)

    # --- decode-size batch, f32 weights: exact PyTorch semantics ----------
    B = 8
    x_t = jax.random.normal(k_x, (B, HIDDEN_DIM + EMB_DIM), jnp.float32)
    prev_h_t = jax.random.normal(k_h, (B, HIDDEN_DIM), jnp.float32)
    m_t = jax.random.normal(k_m, (B, HIDDEN_DIM), jnp.float32)

    s_f32 = jax.block_until_ready(visual_sentinel(x_t, prev_h_t, m_t, w_x, w_h))
    assert s_f32.shape == (B, HIDDEN_DIM)
    assert jnp.allclose(s_f32, reference(x_t, prev_h_t, m_t), atol=1e-4, rtol=1e-4), \
        "f32 path mismatch"

    # --- multi-tile batch: exercises 512-row tiles + minimal-pad logic ----
    B2 = 1040
    x2 = jax.random.normal(k_x, (B2, HIDDEN_DIM + EMB_DIM), jnp.float32)
    h2 = jax.random.normal(k_h, (B2, HIDDEN_DIM), jnp.float32)
    m2 = jax.random.normal(k_m, (B2, HIDDEN_DIM), jnp.float32)
    s2 = jax.block_until_ready(visual_sentinel(x2, h2, m2, w_x, w_h, tile_b_max=512))
    assert s2.shape == (B2, HIDDEN_DIM)
    assert jnp.allclose(s2, reference(x2, h2, m2), atol=1e-3, rtol=1e-3), \
        "multi-tile path mismatch"

    # --- bf16 weights + bf16 activations (preferred low-precision path:
    #     the cast happens upstream at the caller, not inside the kernel) ---
    wb_x = w_x.astype(jnp.bfloat16)
    wb_h = w_h.astype(jnp.bfloat16)
    xb = x_t.astype(jnp.bfloat16)
    hb = prev_h_t.astype(jnp.bfloat16)
    s_bf16 = jax.block_until_ready(visual_sentinel(xb, hb, m_t, wb_x, wb_h))
    ref_bf16 = (
        jax.nn.sigmoid(
            jnp.dot(xb, wb_x, preferred_element_type=jnp.float32)
            + jnp.dot(hb, wb_h, preferred_element_type=jnp.float32)
        )
        * jnp.tanh(m_t)
    )
    assert s_bf16.shape == (B, HIDDEN_DIM)
    assert jnp.allclose(s_bf16.astype(jnp.float32), ref_bf16, atol=1e-2, rtol=1e-2), \
        "bf16 path mismatch"

    print("KERNEL_OK")
</pallas_src>

<mosaic_0001>
module attributes {stable_mosaic.version = 11 : i64} {
  func.func @_sentinel_kernel(%arg0: i32, %arg1: memref<8x1024xf32, #tpu.memory_space<vmem>>, %arg2: memref<8x512xf32, #tpu.memory_space<vmem>>, %arg3: memref<8x512xf32, #tpu.memory_space<vmem>>, %arg4: memref<1024x512xf32, #tpu.memory_space<vmem>>, %arg5: memref<512x512xf32, #tpu.memory_space<vmem>>, %arg6: memref<8x512xf32, #tpu.memory_space<vmem>>) attributes {dimension_semantics = [#tpu.dimension_semantics<arbitrary>], iteration_bounds = array<i64: 1>, scalar_prefetch = 0 : i64, scratch_operands = 0 : i64, tpu.core_type = #tpu.core_type<tc>, window_params = [{transform_indices = @transform_0, window_bounds = array<i64: 8, 1024>}, {transform_indices = @transform_1, window_bounds = array<i64: 8, 512>}, {transform_indices = @transform_2, window_bounds = array<i64: 8, 512>}, {pipeline_mode = #tpu.pipeline_mode<synchronous>, transform_indices = @transform_3, window_bounds = array<i64: 1024, 512>}, {pipeline_mode = #tpu.pipeline_mode<synchronous>, transform_indices = @transform_4, window_bounds = array<i64: 512, 512>}, {transform_indices = @transform_5, window_bounds = array<i64: 8, 512>}]} {
    %c0 = arith.constant 0 : index
    %c0_0 = arith.constant 0 : index
    %0 = vector.load %arg4[%c0, %c0_0] : memref<1024x512xf32, #tpu.memory_space<vmem>>, vector<1024x512xf32>
    %c0_1 = arith.constant 0 : index
    %c0_2 = arith.constant 0 : index
    %1 = vector.load %arg5[%c0_1, %c0_2] : memref<512x512xf32, #tpu.memory_space<vmem>>, vector<512x512xf32>
    %c0_3 = arith.constant 0 : index
    %c0_4 = arith.constant 0 : index
    %2 = vector.load %arg1[%c0_3, %c0_4] : memref<8x1024xf32, #tpu.memory_space<vmem>>, vector<8x1024xf32>
    %c0_5 = arith.constant 0 : index
    %c0_6 = arith.constant 0 : index
    %3 = vector.load %arg2[%c0_5, %c0_6] : memref<8x512xf32, #tpu.memory_space<vmem>>, vector<8x512xf32>
    %cst = arith.constant dense<0.000000e+00> : vector<8x512xf32>
    %4 = tpu.matmul %2, %0, %cst {dimension_numbers = #tpu.dot_dimension_numbers<[1], [0], [0], [1], [0, 0, 1, 1], [], []>} : vector<8x1024xf32>, vector<1024x512xf32>, vector<8x512xf32> -> vector<8x512xf32>
    %cst_7 = arith.constant dense<0.000000e+00> : vector<8x512xf32>
    %5 = tpu.matmul %3, %1, %cst_7 {dimension_numbers = #tpu.dot_dimension_numbers<[1], [0], [0], [1], [0, 0, 1, 1], [], []>} : vector<8x512xf32>, vector<512x512xf32>, vector<8x512xf32> -> vector<8x512xf32>
    %6 = arith.addf %4, %5 : vector<8x512xf32>
    %7 = arith.negf %6 : vector<8x512xf32>
    %8 = math.exp %7 : vector<8x512xf32>
    %cst_8 = arith.constant 1.000000e+00 : f32
    %9 = vector.broadcast %cst_8 : f32 to vector<8x512xf32>
    %10 = arith.addf %9, %8 : vector<8x512xf32>
    %11 = arith.divf %9, %10 : vector<8x512xf32>
    %c0_9 = arith.constant 0 : index
    %c0_10 = arith.constant 0 : index
    %12 = vector.load %arg3[%c0_9, %c0_10] : memref<8x512xf32, #tpu.memory_space<vmem>>, vector<8x512xf32>
    %13 = math.tanh %12 : vector<8x512xf32>
    %14 = arith.mulf %11, %13 : vector<8x512xf32>
    %c0_11 = arith.constant 0 : index
    %c0_12 = arith.constant 0 : index
    %15 = vector.load %arg6[%c0_11, %c0_12] : memref<8x512xf32, #tpu.memory_space<vmem>>, vector<8x512xf32>
    tpu.vector_store %arg6[%c0_11, %c0_12], %14 {strides = array<i32>} : memref<8x512xf32, #tpu.memory_space<vmem>>, vector<8x512xf32>,
    return
  }
  func.func @transform_0(%arg0: i32) -> (i32, i32) {
    %c0_i32 = arith.constant 0 : i32
    %c0_i32_0 = arith.constant 0 : i32
    return %arg0, %c0_i32 : i32, i32
  }
  func.func @transform_1(%arg0: i32) -> (i32, i32) {
    %c0_i32 = arith.constant 0 : i32
    %c0_i32_0 = arith.constant 0 : i32
    return %arg0, %c0_i32 : i32, i32
  }
  func.func @transform_2(%arg0: i32) -> (i32, i32) {
    %c0_i32 = arith.constant 0 : i32
    %c0_i32_0 = arith.constant 0 : i32
    return %arg0, %c0_i32 : i32, i32
  }
  func.func @transform_3(%arg0: i32) -> (i32, i32) {
    %c0_i32 = arith.constant 0 : i32
    %c0_i32_0 = arith.constant 0 : i32
    %c0_i32_1 = arith.constant 0 : i32
    return %c0_i32, %c0_i32_0 : i32, i32
  }
  func.func @transform_4(%arg0: i32) -> (i32, i32) {
    %c0_i32 = arith.constant 0 : i32
    %c0_i32_0 = arith.constant 0 : i32
    %c0_i32_1 = arith.constant 0 : i32
    return %c0_i32, %c0_i32_0 : i32, i32
  }
  func.func @transform_5(%arg0: i32) -> (i32, i32) {
    %c0_i32 = arith.constant 0 : i32
    %c0_i32_0 = arith.constant 0 : i32
    return %arg0, %c0_i32 : i32, i32
  }
}

</mosaic_0001>

<llo_original>
// kernel: tpu_custom_call.1
$region0: #{tpu_custom_call.1}
  #allocation0 [shape = 'u32[]', space=smem, size = 0x4, offset = 0x4, fixed_abs, tag = 'smem constant byte address 0x4 - core index']
  #allocation1 [shape = 'u32[72,128]{1,0:T(1,128)}', space=vmem, size = 0x9000, scoped, tag = 'internal scratch']
  %s0 = inlined_call_operand.hbm [shape: f32[8,1024], index: 0, kind: input, shape index: {}]
  %s1 = inlined_call_operand.hbm [shape: f32[8,512], index: 1, kind: input, shape index: {}]
  %s2 = inlined_call_operand.hbm [shape: f32[8,512], index: 2, kind: input, shape index: {}]
  %s3 = inlined_call_operand.hbm [shape: f32[1024,512], index: 3, kind: input, shape index: {}]
  %s4 = inlined_call_operand.hbm [shape: f32[512,512], index: 4, kind: input, shape index: {}]
  %s5 = inlined_call_operand.hbm [shape: f32[8,512], index: 5, kind: output, shape index: {}]
  %s6 = sld [smem:[#allocation0]]
  $region50: #{tpu_custom_call.1} parent=0
    _
  %s8 = ssub.s32 1, %s6
  %s9 = scalar_select 0, %s8, %s6
  $region1: #{tpu_custom_call.1} parent=0
    #allocation2 [shape = 'u8[32768]{0}', space=vmem, size = 0x8000, scoped, tag = 'input window, operand 0, single buffered']
    #allocation3 [shape = 's32[1]{0}', space=sflag, size = 0x4, scoped, tag = 'scoped memory for tpu_custom_call.1']
    #allocation4 [shape = 's32[1]{0}', space=sflag, size = 0x4, scoped, tag = 'scoped memory for tpu_custom_call.1']
    #allocation5 [shape = 'u8[16384]{0}', space=vmem, size = 0x4000, scoped, tag = 'input window, operand 1, single buffered']
    #allocation6 [shape = 's32[1]{0}', space=sflag, size = 0x4, scoped, tag = 'scoped memory for tpu_custom_call.1']
    #allocation7 [shape = 'u8[16384]{0}', space=vmem, size = 0x4000, scoped, tag = 'input window, operand 2, single buffered']
    #allocation8 [shape = 'u8[2097152]{0}', space=vmem, size = 0x200000, scoped, tag = 'input window, operand 3, single buffered']
    #allocation9 [shape = 's32[1]{0}', space=sflag, size = 0x4, scoped, tag = 'scoped memory for tpu_custom_call.1']
    #allocation10 [shape = 'u8[1048576]{0}', space=vmem, size = 0x100000, scoped, tag = 'input window, operand 4, single buffered']
    #allocation11 [shape = 'u8[16384]{0}', space=vmem, size = 0x4000, scoped, tag = 'output window, operand 0, single buffered']
    %10 = vsyncpa [#allocation3], 0
    %11 = vsyncpa [#allocation6], 0
    %12 = vsyncpa [#allocation9], 0
    %13 = vsyncpa [#allocation4], 0
    // Predicated region
    $region2: #{tpu_custom_call.1} parent=1 // pred_check
      _
    $region3: #{tpu_custom_call.1} parent=1 // pred_check_branch
      %15 = sbr.rel (0) target = $region5
    $region4: #{tpu_custom_call.1} parent=1 // pred_region
      %17 = vsyncadd [#allocation3], 0
      %s19 = sshll.u32 %s0, 4
      %s20 = int_to_ptr.hbm [resolvable:$true] %s19
      %s21 = sshll.u32 [#allocation2], 4
      %s22 = int_to_ptr.vmem [resolvable:$true] %s21
      %24 = dma.hbm_to_vmem [thread:$0]  %s20, 1024, %s22, [#allocation3]
    $region5: #{tpu_custom_call.1} parent=1 // pred_fallthru
      _
    // Predicated region
    $region6: #{tpu_custom_call.1} parent=1 // pred_check
      _
    $region7: #{tpu_custom_call.1} parent=1 // pred_check_branch
      %26 = sbr.rel (0) target = $region9
    $region8: #{tpu_custom_call.1} parent=1 // pred_region
      %28 = vsyncadd [#allocation6], 0
      %s30 = sshll.u32 %s1, 4
      %s31 = int_to_ptr.hbm [resolvable:$true] %s30
      %s32 = sshll.u32 [#allocation5], 4
      %s33 = int_to_ptr.vmem [resolvable:$true] %s32
      %35 = dma.hbm_to_vmem [thread:$0]  %s31, 512, %s33, [#allocation6]
    $region9: #{tpu_custom_call.1} parent=1 // pred_fallthru
      _
    // Predicated region
    $region10: #{tpu_custom_call.1} parent=1 // pred_check
      _
    $region11: #{tpu_custom_call.1} parent=1 // pred_check_branch
      %37 = sbr.rel (0) target = $region13
    $region12: #{tpu_custom_call.1} parent=1 // pred_region
      %39 = vsyncadd [#allocation6], 0
      %s41 = sshll.u32 %s2, 4
      %s42 = int_to_ptr.hbm [resolvable:$true] %s41
      %s43 = sshll.u32 [#allocation7], 4
      %s44 = int_to_ptr.vmem [resolvable:$true] %s43
      %46 = dma.hbm_to_vmem [thread:$0]  %s42, 512, %s44, [#allocation6]
    $region13: #{tpu_custom_call.1} parent=1 // pred_fallthru
      _
    // Predicated region
    $region14: #{tpu_custom_call.1} parent=1 // pred_check
      _
    $region15: #{tpu_custom_call.1} parent=1 // pred_check_branch
      %48 = sbr.rel (0) target = $region17
    $region16: #{tpu_custom_call.1} parent=1 // pred_region
      %50 = vsyncadd [#allocation9], 0
      %s51 = sshll.u32 %s3, 4
      %s52 = int_to_ptr.hbm [resolvable:$true] %s51
      %s53 = sshll.u32 [#allocation8], 4
      %s54 = int_to_ptr.vmem [resolvable:$true] %s53
      %59 = dma.hbm_to_vmem [thread:$0]  %s52, 65536, %s54, [#allocation9], 512, 512, 32
    $region17: #{tpu_custom_call.1} parent=1 // pred_fallthru
      _
    // Predicated region
    $region18: #{tpu_custom_call.1} parent=1 // pred_check
      _
    $region19: #{tpu_custom_call.1} parent=1 // pred_check_branch
      %61 = sbr.rel (0) target = $region21
    $region20: #{tpu_custom_call.1} parent=1 // pred_region
      %63 = vsyncadd [#allocation9], 0
      %s64 = sshll.u32 %s4, 4
      %s65 = int_to_ptr.hbm [resolvable:$true] %s64
      %s66 = sshll.u32 [#allocation10], 4
      %s67 = int_to_ptr.vmem [resolvable:$true] %s66
      %72 = dma.hbm_to_vmem [thread:$0]  %s65, 32768, %s67, [#allocation9], 512, 512, 32
    $region21: #{tpu_custom_call.1} parent=1 // pred_fallthru
      _
    // Predicated region
    $region22: #{tpu_custom_call.1} parent=1 // pred_check
      _
    $region23: #{tpu_custom_call.1} parent=1 // pred_check_branch
      %74 = sbr.rel (0) target = $region25
    $region24: #{tpu_custom_call.1} parent=1 // pred_region
      %76 = dma.done [#allocation3], 1024
    $region25: #{tpu_custom_call.1} parent=1 // pred_fallthru
      _
    // Predicated region
    $region26: #{tpu_custom_call.1} parent=1 // pred_check
      _
    $region27: #{tpu_custom_call.1} parent=1 // pred_check_branch
      %78 = sbr.rel (0) target = $region29
    $region28: #{tpu_custom_call.1} parent=1 // pred_region
      %80 = dma.done [#allocation6], 512
    $region29: #{tpu_custom_call.1} parent=1 // pred_fallthru
      _
    // Predicated region
    $region30: #{tpu_custom_call.1} parent=1 // pred_check
      _
    $region31: #{tpu_custom_call.1} parent=1 // pred_check_branch
      %82 = sbr.rel (0) target = $region33
    $region32: #{tpu_custom_call.1} parent=1 // pred_region
      %84 = dma.done [#allocation6], 512
    $region33: #{tpu_custom_call.1} parent=1 // pred_fallthru
      _
    // Predicated region
    $region34: #{tpu_custom_call.1} parent=1 // pred_check
      _
    $region35: #{tpu_custom_call.1} parent=1 // pred_check_branch
      %86 = sbr.rel (0) target = $region37
    $region36: #{tpu_custom_call.1} parent=1 // pred_region
      %88 = dma.done [#allocation9], 65536
    $region37: #{tpu_custom_call.1} parent=1 // pred_fallthru
      _
    // Predicated region
    $region38: #{tpu_custom_call.1} parent=1 // pred_check
      _
    $region39: #{tpu_custom_call.1} parent=1 // pred_check_branch
      %90 = sbr.rel (0) target = $region41
    $region40: #{tpu_custom_call.1} parent=1 // pred_region
      %92 = dma.done [#allocation9], 32768
    $region41: #{tpu_custom_call.1} parent=1 // pred_fallthru
      _
    %v93 = vld [vmem:[#allocation8] sm:$0xff]
    %v94 = vld [vmem:[#allocation8 + $0x8] sm:$0xff]
    %v95 = vld [vmem:[#allocation8 + $0x10] sm:$0xff]
    %v96 = vld [vmem:[#allocation8 + $0x18] sm:$0xff]
    %v97 = vld [vmem:[#allocation8 + $0x20] sm:$0xff]
    %v98 = vld [vmem:[#allocation8 + $0x28] sm:$0xff]
    %v99 = vld [vmem:[#allocation8 + $0x30] sm:$0xff]
    %v100 = vld [vmem:[#allocation8 + $0x38] sm:$0xff]
    %v101 = vld [vmem:[#allocation8 + $0x40] sm:$0xff]
    %v102 = vld [vmem:[#allocation8 + $0x48] sm:$0xff]
    %v103 = vld [vmem:[#allocation8 + $0x50] sm:$0xff]
    %v104 = vld [vmem:[#allocation8 + $0x58] sm:$0xff]
    %v105 = vld [vmem:[#allocation8 + $0x60] sm:$0xff]
    %v106 = vld [vmem:[#allocation8 + $0x68] sm:$0xff]
    %v107 = vld [vmem:[#allocation8 + $0x70] sm:$0xff]
    %v108 = vld [vmem:[#allocation8 + $0x78] sm:$0xff]
    %v109 = vld [vmem:[#allocation8 + $0x80] sm:$0xff]
    %v110 = vld [vmem:[#allocation8 + $0x88] sm:$0xff]
    %v111 = vld [vmem:[#allocation8 + $0x90] sm:$0xff]
    %v112 = vld [vmem:[#allocation8 + $0x98] sm:$0xff]
    %v113 = vld [vmem:[#allocation8 + $0xa0] sm:$0xff]
    %v114 = vld [vmem:[#allocation8 + $0xa8] sm:$0xff]
    %v115 = vld [vmem:[#allocation8 + $0xb0] sm:$0xff]
    %v116 = vld [vmem:[#allocation8 + $0xb8] sm:$0xff]
    %v117 = vld [vmem:[#allocation8 + $0xc0] sm:$0xff]
    %v118 = vld [vmem:[#allocation8 + $0xc8] sm:$0xff]
    %v119 = vld [vmem:[#allocation8 + $0xd0] sm:$0xff]
    %v120 = vld [vmem:[#allocation8 + $0xd8] sm:$0xff]
    %v121 = vld [vmem:[#allocation8 + $0xe0] sm:$0xff]
    %v122 = vld [vmem:[#allocation8 + $0xe8] sm:$0xff]
    %v123 = vld [vmem:[#allocation8 + $0xf0] sm:$0xff]
    %v124 = vld [vmem:[#allocation8 + $0xf8] sm:$0xff]
    %v125 = vld [vmem:[#allocation8 + $0x100] sm:$0xff]
    %v126 = vld [vmem:[#allocation8 + $0x108] sm:$0xff]
    %v127 = vld [vmem:[#allocation8 + $0x110] sm:$0xff]
    %v128 = vld [vmem:[#allocation8 + $0x118] sm:$0xff]
    %v129 = vld [vmem:[#allocation8 + $0x120] sm:$0xff]
    %v130 = vld [vmem:[#allocation8 + $0x128] sm:$0xff]
    %v131 = vld [vmem:[#allocation8 + $0x130] sm:$0xff]
    %v132 = vld [vmem:[#allocation8 + $0x138] sm:$0xff]
    %v133 = vld [vmem:[#allocation8 + $0x140] sm:$0xff]
    %v134 = vld [vmem:[#allocation8 + $0x148] sm:$0xff]
    %v135 = vld [vmem:[#allocation8 + $0x150] sm:$0xff]
    %v136 = vld [vmem:[#allocation8 + $0x158] sm:$0xff]
    %v137 = vld [vmem:[#allocation8 + $0x160] sm:$0xff]
    %v138 = vld [vmem:[#allocation8 + $0x168] sm:$0xff]
    %v139 = vld [vmem:[#allocation8 + $0x170] sm:$0xff]
    %v140 = vld [vmem:[#allocation8 + $0x178] sm:$0xff]
    %v141 = vld [vmem:[#allocation8 + $0x180] sm:$0xff]
    %v142 = vld [vmem:[#allocation8 + $0x188] sm:$0xff]
    %v143 = vld [vmem:[#allocation8 + $0x190] sm:$0xff]
    %v144 = vld [vmem:[#allocation8 + $0x198] sm:$0xff]
    %v145 = vld [vmem:[#allocation8 + $0x1a0] sm:$0xff]
    %v146 = vld [vmem:[#allocation8 + $0x1a8] sm:$0xff]
    %v147 = vld [vmem:[#allocation8 + $0x1b0] sm:$0xff]
    %v148 = vld [vmem:[#allocation8 + $0x1b8] sm:$0xff]
    %v149 = vld [vmem:[#allocation8 + $0x1c0] sm:$0xff]
    %v150 = vld [vmem:[#allocation8 + $0x1c8] sm:$0xff]
    %v151 = vld [vmem:[#allocation8 + $0x1d0] sm:$0xff]
    %v152 = vld [vmem:[#allocation8 + $0x1d8] sm:$0xff]
    %v153 = vld [vmem:[#allocation8 + $0x1e0] sm:$0xff]
    %v154 = vld [vmem:[#allocation8 + $0x1e8] sm:$0xff]
    %v155 = vld [vmem:[#allocation8 + $0x1f0] sm:$0xff]
    %v156 = vld [vmem:[#allocation8 + $0x1f8] sm:$0xff]
    %v157 = vld [vmem:[#allocation8 + $0x200] sm:$0xff]
    %v158 = vld [vmem:[#allocation8 + $0x208] sm:$0xff]
    %v159 = vld [vmem:[#allocation8 + $0x210] sm:$0xff]
    %v160 = vld [vmem:[#allocation8 + $0x218] sm:$0xff]
    %v161 = vld [vmem:[#allocation8 + $0x220] sm:$0xff]
    %v162 = vld [vmem:[#allocation8 + $0x228] sm:$0xff]
    %v163 = vld [vmem:[#allocation8 + $0x230] sm:$0xff]
    %v164 = vld [vmem:[#allocation8 + $0x238] sm:$0xff]
    %v165 = vld [vmem:[#allocation8 + $0x240] sm:$0xff]
    %v166 = vld [vmem:[#allocation8 + $0x248] sm:$0xff]
    %v167 = vld [vmem:[#allocation8 + $0x250] sm:$0xff]
    %v168 = vld [vmem:[#allocation8 + $0x258] sm:$0xff]
    %v169 = vld [vmem:[#allocation8 + $0x260] sm:$0xff]
    %v170 = vld [vmem:[#allocation8 + $0x268] sm:$0xff]
    %v171 = vld [vmem:[#allocation8 + $0x270] sm:$0xff]
    %v172 = vld [vmem:[#allocation8 + $0x278] sm:$0xff]
    %v173 = vld [vmem:[#allocation8 + $0x280] sm:$0xff]
    %v174 = vld [vmem:[#allocation8 + $0x288] sm:$0xff]
    %v175 = vld [vmem:[#allocation8 + $0x290] sm:$0xff]
    %v176 = vld [vmem:[#allocation8 + $0x298] sm:$0xff]
    %v177 = vld [vmem:[#allocation8 + $0x2a0] sm:$0xff]
    %v178 = vld [vmem:[#allocation8 + $0x2a8] sm:$0xff]
    %v179 = vld [vmem:[#allocation8 + $0x2b0] sm:$0xff]
    %v180 = vld [vmem:[#allocation8 + $0x2b8] sm:$0xff]
    %v181 = vld [vmem:[#allocation8 + $0x2c0] sm:$0xff]
    %v182 = vld [vmem:[#allocation8 + $0x2c8] sm:$0xff]
    %v183 = vld [vmem:[#allocation8 + $0x2d0] sm:$0xff]
    %v184 = vld [vmem:[#allocation8 + $0x2d8] sm:$0xff]
    %v185 = vld [vmem:[#allocation8 + $0x2e0] sm:$0xff]
    %v186 = vld [vmem:[#allocation8 + $0x2e8] sm:$0xff]
    %v187 = vld [vmem:[#allocation8 + $0x2f0] sm:$0xff]
    %v188 = vld [vmem:[#allocation8 + $0x2f8] sm:$0xff]
    %v189 = vld [vmem:[#allocation8 + $0x300] sm:$0xff]
    %v190 = vld [vmem:[#allocation8 + $0x308] sm:$0xff]
    %v191 = vld [vmem:[#allocation8 + $0x310] sm:$0xff]
    %v192 = vld [vmem:[#allocation8 + $0x318] sm:$0xff]
    %v193 = vld [vmem:[#allocation8 + $0x320] sm:$0xff]
    %v194 = vld [vmem:[#allocation8 + $0x328] sm:$0xff]
    %v195 = vld [vmem:[#allocation8 + $0x330] sm:$0xff]
    %v196 = vld [vmem:[#allocation8 + $0x338] sm:$0xff]
    %v197 = vld [vmem:[#allocation8 + $0x340] sm:$0xff]
    %v198 = vld [vmem:[#allocation8 + $0x348] sm:$0xff]
    %v199 = vld [vmem:[#allocation8 + $0x350] sm:$0xff]
    %v200 = vld [vmem:[#allocation8 + $0x358] sm:$0xff]
    %v201 = vld [vmem:[#allocation8 + $0x360] sm:$0xff]
    %v202 = vld [vmem:[#allocation8 + $0x368] sm:$0xff]
    %v203 = vld [vmem:[#allocation8 + $0x370] sm:$0xff]
    %v204 = vld [vmem:[#allocation8 + $0x378] sm:$0xff]
    %v205 = vld [vmem:[#allocation8 + $0x380] sm:$0xff]
    %v206 = vld [vmem:[#allocation8 + $0x388] sm:$0xff]
    %v207 = vld [vmem:[#allocation8 + $0x390] sm:$0xff]
    %v208 = vld [vmem:[#allocation8 + $0x398] sm:$0xff]
    %v209 = vld [vmem:[#allocation8 + $0x3a0] sm:$0xff]
    %v210 = vld [vmem:[#allocation8 + $0x3a8] sm:$0xff]
    %v211 = vld [vmem:[#allocation8 + $0x3b0] sm:$0xff]
    %v212 = vld [vmem:[#allocation8 + $0x3b8] sm:$0xff]
    %v213 = vld [vmem:[#allocation8 + $0x3c0] sm:$0xff]
    %v214 = vld [vmem:[#allocation8 + $0x3c8] sm:$0xff]
    %v215 = vld [vmem:[#allocation8 + $0x3d0] sm:$0xff]
    %v216 = vld [vmem:[#allocation8 + $0x3d8] sm:$0xff]
    %v217 = vld [vmem:[#allocation8 + $0x3e0] sm:$0xff]
    %v218 = vld [vmem:[#allocation8 + $0x3e8] sm:$0xff]
    %v219 = vld [vmem:[#allocation8 + $0x3f0] sm:$0xff]
    %v220 = vld [vmem:[#allocation8 + $0x3f8] sm:$0xff]
    %v221 = vld [vmem:[#allocation8 + $0x400] sm:$0xff]
    %v222 = vld [vmem:[#allocation8 + $0x408] sm:$0xff]
    %v223 = vld [vmem:[#allocation8 + $0x410] sm:$0xff]
    %v224 = vld [vmem:[#allocation8 + $0x418] sm:$0xff]
    %v225 = vld [vmem:[#allocation8 + $0x420] sm:$0xff]
    %v226 = vld [vmem:[#allocation8 + $0x428] sm:$0xff]
    %v227 = vld [vmem:[#allocation8 + $0x430] sm:$0xff]
    %v228 = vld [vmem:[#allocation8 + $0x438] sm:$0xff]
    %v229 = vld [vmem:[#allocation8 + $0x440] sm:$0xff]
    %v230 = vld [vmem:[#allocation8 + $0x448] sm:$0xff]
    %v231 = vld [vmem:[#allocation8 + $0x450] sm:$0xff]
    %v232 = vld [vmem:[#allocation8 + $0x458] sm:$0xff]
    %v233 = vld [vmem:[#allocation8 + $0x460] sm:$0xff]
    %v234 = vld [vmem:[#allocation8 + $0x468] sm:$0xff]
    %v235 = vld [vmem:[#allocation8 + $0x470] sm:$0xff]
    %v236 = vld [vmem:[#allocation8 + $0x478] sm:$0xff]
    %v237 = vld [vmem:[#allocation8 + $0x480] sm:$0xff]
    %v238 = vld [vmem:[#allocation8 + $0x488] sm:$0xff]
    %v239 = vld [vmem:[#allocation8 + $0x490] sm:$0xff]
    %v240 = vld [vmem:[#allocation8 + $0x498] sm:$0xff]
    %v241 = vld [vmem:[#allocation8 + $0x4a0] sm:$0xff]
    %v242 = vld [vmem:[#allocation8 + $0x4a8] sm:$0xff]
    %v243 = vld [vmem:[#allocation8 + $0x4b0] sm:$0xff]
    %v244 = vld [vmem:[#allocation8 + $0x4b8] sm:$0xff]
    %v245 = vld [vmem:[#allocation8 + $0x4c0] sm:$0xff]
    %v246 = vld [vmem:[#allocation8 + $0x4c8] sm:$0xff]
    %v247 = vld [vmem:[#allocation8 + $0x4d0] sm:$0xff]
    %v248 = vld [vmem:[#allocation8 + $0x4d8] sm:$0xff]
    %v249 = vld [vmem:[#allocation8 + $0x4e0] sm:$0xff]
    %v250 = vld [vmem:[#allocation8 + $0x4e8] sm:$0xff]
    %v251 = vld [vmem:[#allocation8 + $0x4f0] sm:$0xff]
    %v252 = vld [vmem:[#allocation8 + $0x4f8] sm:$0xff]
    %v253 = vld [vmem:[#allocation8 + $0x500] sm:$0xff]
    %v254 = vld [vmem:[#allocation8 + $0x508] sm:$0xff]
    %v255 = vld [vmem:[#allocation8 + $0x510] sm:$0xff]
    %v256 = vld [vmem:[#allocation8 + $0x518] sm:$0xff]
    %v257 = vld [vmem:[#allocation8 + $0x520] sm:$0xff]
    %v258 = vld [vmem:[#allocation8 + $0x528] sm:$0xff]
    %v259 = vld [vmem:[#allocation8 + $0x530] sm:$0xff]
    %v260 = vld [vmem:[#allocation8 + $0x538] sm:$0xff]
    %v261 = vld [vmem:[#allocation8 + $0x540] sm:$0xff]
    %v262 = vld [vmem:[#allocation8 + $0x548] sm:$0xff]
    %v263 = vld [vmem:[#allocation8 + $0x550] sm:$0xff]
    %v264 = vld [vmem:[#allocation8 + $0x558] sm:$0xff]
    %v265 = vld [vmem:[#allocation8 + $0x560] sm:$0xff]
    %v266 = vld [vmem:[#allocation8 + $0x568] sm:$0xff]
    %v267 = vld [vmem:[#allocation8 + $0x570] sm:$0xff]
    %v268 = vld [vmem:[#allocation8 + $0x578] sm:$0xff]
    %v269 = vld [vmem:[#allocation8 + $0x580] sm:$0xff]
    %v270 = vld [vmem:[#allocation8 + $0x588] sm:$0xff]
    %v271 = vld [vmem:[#allocation8 + $0x590] sm:$0xff]
    %v272 = vld [vmem:[#allocation8 + $0x598] sm:$0xff]
    %v273 = vld [vmem:[#allocation8 + $0x5a0] sm:$0xff]
    %v274 = vld [vmem:[#allocation8 + $0x5a8] sm:$0xff]
    %v275 = vld [vmem:[#allocation8 + $0x5b0] sm:$0xff]
    %v276 = vld [vmem:[#allocation8 + $0x5b8] sm:$0xff]
    %v277 = vld [vmem:[#allocation8 + $0x5c0] sm:$0xff]
    %v278 = vld [vmem:[#allocation8 + $0x5c8] sm:$0xff]
    %v279 = vld [vmem:[#allocation8 + $0x5d0] sm:$0xff]
    %v280 = vld [vmem:[#allocation8 + $0x5d8] sm:$0xff]
    %v281 = vld [vmem:[#allocation8 + $0x5e0] sm:$0xff]
    %v282 = vld [vmem:[#allocation8 + $0x5e8] sm:$0xff]
    %v283 = vld [vmem:[#allocation8 + $0x5f0] sm:$0xff]
    %v284 = vld [vmem:[#allocation8 + $0x5f8] sm:$0xff]
    %v285 = vld [vmem:[#allocation8 + $0x600] sm:$0xff]
    %v286 = vld [vmem:[#allocation8 + $0x608] sm:$0xff]
    %v287 = vld [vmem:[#allocation8 + $0x610] sm:$0xff]
    %v288 = vld [vmem:[#allocation8 + $0x618] sm:$0xff]
    %v289 = vld [vmem:[#allocation8 + $0x620] sm:$0xff]
    %v290 = vld [vmem:[#allocation8 + $0x628] sm:$0xff]
    %v291 = vld [vmem:[#allocation8 + $0x630] sm:$0xff]
    %v292 = vld [vmem:[#allocation8 + $0x638] sm:$0xff]
    %v293 = vld [vmem:[#allocation8 + $0x640] sm:$0xff]
    %v294 = vld [vmem:[#allocation8 + $0x648] sm:$0xff]
    %v295 = vld [vmem:[#allocation8 + $0x650] sm:$0xff]
    %v296 = vld [vmem:[#allocation8 + $0x658] sm:$0xff]
    %v297 = vld [vmem:[#allocation8 + $0x660] sm:$0xff]
    %v298 = vld [vmem:[#allocation8 + $0x668] sm:$0xff]
    %v299 = vld [vmem:[#allocation8 + $0x670] sm:$0xff]
    %v300 = vld [vmem:[#allocation8 + $0x678] sm:$0xff]
    %v301 = vld [vmem:[#allocation8 + $0x680] sm:$0xff]
    %v302 = vld [vmem:[#allocation8 + $0x688] sm:$0xff]
    %v303 = vld [vmem:[#allocation8 + $0x690] sm:$0xff]
    %v304 = vld [vmem:[#allocation8 + $0x698] sm:$0xff]
    %v305 = vld [vmem:[#allocation8 + $0x6a0] sm:$0xff]
    %v306 = vld [vmem:[#allocation8 + $0x6a8] sm:$0xff]
    %v307 = vld [vmem:[#allocation8 + $0x6b0] sm:$0xff]
    %v308 = vld [vmem:[#allocation8 + $0x6b8] sm:$0xff]
    %v309 = vld [vmem:[#allocation8 + $0x6c0] sm:$0xff]
    %v310 = vld [vmem:[#allocation8 + $0x6c8] sm:$0xff]
    %v311 = vld [vmem:[#allocation8 + $0x6d0] sm:$0xff]
    %v312 = vld [vmem:[#allocation8 + $0x6d8] sm:$0xff]
    %v313 = vld [vmem:[#allocation8 + $0x6e0] sm:$0xff]
    %v314 = vld [vmem:[#allocation8 + $0x6e8] sm:$0xff]
    %v315 = vld [vmem:[#allocation8 + $0x6f0] sm:$0xff]
    %v316 = vld [vmem:[#allocation8 + $0x6f8] sm:$0xff]
    %v317 = vld [vmem:[#allocation8 + $0x700] sm:$0xff]
    %v318 = vld [vmem:[#allocation8 + $0x708] sm:$0xff]
    %v319 = vld [vmem:[#allocation8 + $0x710] sm:$0xff]
    %v320 = vld [vmem:[#allocation8 + $0x718] sm:$0xff]
    %v321 = vld [vmem:[#allocation8 + $0x720] sm:$0xff]
    %v322 = vld [vmem:[#allocation8 + $0x728] sm:$0xff]
    %v323 = vld [vmem:[#allocation8 + $0x730] sm:$0xff]
    %v324 = vld [vmem:[#allocation8 + $0x738] sm:$0xff]
    %v325 = vld [vmem:[#allocation8 + $0x740] sm:$0xff]
    %v326 = vld [vmem:[#allocation8 + $0x748] sm:$0xff]
    %v327 = vld [vmem:[#allocation8 + $0x750] sm:$0xff]
    %v328 = vld [vmem:[#allocation8 + $0x758] sm:$0xff]
    %v329 = vld [vmem:[#allocation8 + $0x760] sm:$0xff]
    %v330 = vld [vmem:[#allocation8 + $0x768] sm:$0xff]
    %v331 = vld [vmem:[#allocation8 + $0x770] sm:$0xff]
    %v332 = vld [vmem:[#allocation8 + $0x778] sm:$0xff]
    %v333 = vld [vmem:[#allocation8 + $0x780] sm:$0xff]
    %v334 = vld [vmem:[#allocation8 + $0x788] sm:$0xff]
    %v335 = vld [vmem:[#allocation8 + $0x790] sm:$0xff]
    %v336 = vld [vmem:[#allocation8 + $0x798] sm:$0xff]
    %v337 = vld [vmem:[#allocation8 + $0x7a0] sm:$0xff]
    %v338 = vld [vmem:[#allocation8 + $0x7a8] sm:$0xff]
    %v339 = vld [vmem:[#allocation8 + $0x7b0] sm:$0xff]
    %v340 = vld [vmem:[#allocation8 + $0x7b8] sm:$0xff]
    %v341 = vld [vmem:[#allocation8 + $0x7c0] sm:$0xff]
    %v342 = vld [vmem:[#allocation8 + $0x7c8] sm:$0xff]
    %v343 = vld [vmem:[#allocation8 + $0x7d0] sm:$0xff]
    %v344 = vld [vmem:[#allocation8 + $0x7d8] sm:$0xff]
    %v345 = vld [vmem:[#allocation8 + $0x7e0] sm:$0xff]
    %v346 = vld [vmem:[#allocation8 + $0x7e8] sm:$0xff]
    %v347 = vld [vmem:[#allocation8 + $0x7f0] sm:$0xff]
    %v348 = vld [vmem:[#allocation8 + $0x7f8] sm:$0xff]
    %v349 = vld [vmem:[#allocation8 + $0x800] sm:$0xff]
    %v350 = vld [vmem:[#allocation8 + $0x808] sm:$0xff]
    %v351 = vld [vmem:[#allocation8 + $0x810] sm:$0xff]
    %v352 = vld [vmem:[#allocation8 + $0x818] sm:$0xff]
    %v353 = vld [vmem:[#allocation8 + $0x820] sm:$0xff]
    %v354 = vld [vmem:[#allocation8 + $0x828] sm:$0xff]
    %v355 = vld [vmem:[#allocation8 + $0x830] sm:$0xff]
    %v356 = vld [vmem:[#allocation8 + $0x838] sm:$0xff]
    %v357 = vld [vmem:[#allocation8 + $0x840] sm:$0xff]
    %v358 = vld [vmem:[#allocation8 + $0x848] sm:$0xff]
    %v359 = vld [vmem:[#allocation8 + $0x850] sm:$0xff]
    %v360 = vld [vmem:[#allocation8 + $0x858] sm:$0xff]
    %v361 = vld [vmem:[#allocation8 + $0x860] sm:$0xff]
    %v362 = vld [vmem:[#allocation8 + $0x868] sm:$0xff]
    %v363 = vld [vmem:[#allocation8 + $0x870] sm:$0xff]
    %v364 = vld [vmem:[#allocation8 + $0x878] sm:$0xff]
    %v365 = vld [vmem:[#allocation8 + $0x880] sm:$0xff]
    %v366 = vld [vmem:[#allocation8 + $0x888] sm:$0xff]
    %v367 = vld [vmem:[#allocation8 + $0x890] sm:$0xff]
    %v368 = vld [vmem:[#allocation8 + $0x898] sm:$0xff]
    %v369 = vld [vmem:[#allocation8 + $0x8a0] sm:$0xff]
    %v370 = vld [vmem:[#allocation8 + $0x8a8] sm:$0xff]
    %v371 = vld [vmem:[#allocation8 + $0x8b0] sm:$0xff]
    %v372 = vld [vmem:[#allocation8 + $0x8b8] sm:$0xff]
    %v373 = vld [vmem:[#allocation8 + $0x8c0] sm:$0xff]
    %v374 = vld [vmem:[#allocation8 + $0x8c8] sm:$0xff]
    %v375 = vld [vmem:[#allocation8 + $0x8d0] sm:$0xff]
    %v376 = vld [vmem:[#allocation8 + $0x8d8] sm:$0xff]
    %v377 = vld [vmem:[#allocation8 + $0x8e0] sm:$0xff]
    %v378 = vld [vmem:[#allocation8 + $0x8e8] sm:$0xff]
    %v379 = vld [vmem:[#allocation8 + $0x8f0] sm:$0xff]
    %v380 = vld [vmem:[#allocation8 + $0x8f8] sm:$0xff]
    %v381 = vld [vmem:[#allocation8 + $0x900] sm:$0xff]
    %v382 = vld [vmem:[#allocation8 + $0x908] sm:$0xff]
    %v383 = vld [vmem:[#allocation8 + $0x910] sm:$0xff]
    %v384 = vld [vmem:[#allocation8 + $0x918] sm:$0xff]
    %v385 = vld [vmem:[#allocation8 + $0x920] sm:$0xff]
    %v386 = vld [vmem:[#allocation8 + $0x928] sm:$0xff]
    %v387 = vld [vmem:[#allocation8 + $0x930] sm:$0xff]
    %v388 = vld [vmem:[#allocation8 + $0x938] sm:$0xff]
    %v389 = vld [vmem:[#allocation8 + $0x940] sm:$0xff]
    %v390 = vld [vmem:[#allocation8 + $0x948] sm:$0xff]
    %v391 = vld [vmem:[#allocation8 + $0x950] sm:$0xff]
    %v392 = vld [vmem:[#allocation8 + $0x958] sm:$0xff]
    %v393 = vld [vmem:[#allocation8 + $0x960] sm:$0xff]
    %v394 = vld [vmem:[#allocation8 + $0x968] sm:$0xff]
    %v395 = vld [vmem:[#allocation8 + $0x970] sm:$0xff]
    %v396 = vld [vmem:[#allocation8 + $0x978] sm:$0xff]
    %v397 = vld [vmem:[#allocation8 + $0x980] sm:$0xff]
    %v398 = vld [vmem:[#allocation8 + $0x988] sm:$0xff]
    %v399 = vld [vmem:[#allocation8 + $0x990] sm:$0xff]
    %v400 = vld [vmem:[#allocation8 + $0x998] sm:$0xff]
    %v401 = vld [vmem:[#allocation8 + $0x9a0] sm:$0xff]
    %v402 = vld [vmem:[#allocation8 + $0x9a8] sm:$0xff]
    %v403 = vld [vmem:[#allocation8 + $0x9b0] sm:$0xff]
    %v404 = vld [vmem:[#allocation8 + $0x9b8] sm:$0xff]
    %v405 = vld [vmem:[#allocation8 + $0x9c0] sm:$0xff]
    %v406 = vld [vmem:[#allocation8 + $0x9c8] sm:$0xff]
    %v407 = vld [vmem:[#allocation8 + $0x9d0] sm:$0xff]
    %v408 = vld [vmem:[#allocation8 + $0x9d8] sm:$0xff]
    %v409 = vld [vmem:[#allocation8 + $0x9e0] sm:$0xff]
    %v410 = vld [vmem:[#allocation8 + $0x9e8] sm:$0xff]
    %v411 = vld [vmem:[#allocation8 + $0x9f0] sm:$0xff]
    %v412 = vld [vmem:[#allocation8 + $0x9f8] sm:$0xff]
    %v413 = vld [vmem:[#allocation8 + $0xa00] sm:$0xff]
    %v414 = vld [vmem:[#allocation8 + $0xa08] sm:$0xff]
    %v415 = vld [vmem:[#allocation8 + $0xa10] sm:$0xff]
    %v416 = vld [vmem:[#allocation8 + $0xa18] sm:$0xff]
    %v417 = vld [vmem:[#allocation8 + $0xa20] sm:$0xff]
    %v418 = vld [vmem:[#allocation8 + $0xa28] sm:$0xff]
    %v419 = vld [vmem:[#allocation8 + $0xa30] sm:$0xff]
    %v420 = vld [vmem:[#allocation8 + $0xa38] sm:$0xff]
    %v421 = vld [vmem:[#allocation8 + $0xa40] sm:$0xff]
    %v422 = vld [vmem:[#allocation8 + $0xa48] sm:$0xff]
    %v423 = vld [vmem:[#allocation8 + $0xa50] sm:$0xff]
    %v424 = vld [vmem:[#allocation8 + $0xa58] sm:$0xff]
    %v425 = vld [vmem:[#allocation8 + $0xa60] sm:$0xff]
    %v426 = vld [vmem:[#allocation8 + $0xa68] sm:$0xff]
    %v427 = vld [vmem:[#allocation8 + $0xa70] sm:$0xff]
    %v428 = vld [vmem:[#allocation8 + $0xa78] sm:$0xff]
    %v429 = vld [vmem:[#allocation8 + $0xa80] sm:$0xff]
    %v430 = vld [vmem:[#allocation8 + $0xa88] sm:$0xff]
    %v431 = vld [vmem:[#allocation8 + $0xa90] sm:$0xff]
    %v432 = vld [vmem:[#allocation8 + $0xa98] sm:$0xff]
    %v433 = vld [vmem:[#allocation8 + $0xaa0] sm:$0xff]
    %v434 = vld [vmem:[#allocation8 + $0xaa8] sm:$0xff]
    %v435 = vld [vmem:[#allocation8 + $0xab0] sm:$0xff]
    %v436 = vld [vmem:[#allocation8 + $0xab8] sm:$0xff]
    %v437 = vld [vmem:[#allocation8 + $0xac0] sm:$0xff]
    %v438 = vld [vmem:[#allocation8 + $0xac8] sm:$0xff]
    %v439 = vld [vmem:[#allocation8 + $0xad0] sm:$0xff]
    %v440 = vld [vmem:[#allocation8 + $0xad8] sm:$0xff]
    %v441 = vld [vmem:[#allocation8 + $0xae0] sm:$0xff]
    %v442 = vld [vmem:[#allocation8 + $0xae8] sm:$0xff]
    %v443 = vld [vmem:[#allocation8 + $0xaf0] sm:$0xff]
    %v444 = vld [vmem:[#allocation8 + $0xaf8] sm:$0xff]
    %v445 = vld [vmem:[#allocation8 + $0xb00] sm:$0xff]
    %v446 = vld [vmem:[#allocation8 + $0xb08] sm:$0xff]
    %v447 = vld [vmem:[#allocation8 + $0xb10] sm:$0xff]
    %v448 = vld [vmem:[#allocation8 + $0xb18] sm:$0xff]
    %v449 = vld [vmem:[#allocation8 + $0xb20] sm:$0xff]
    %v450 = vld [vmem:[#allocation8 + $0xb28] sm:$0xff]
    %v451 = vld [vmem:[#allocation8 + $0xb30] sm:$0xff]
    %v452 = vld [vmem:[#allocation8 + $0xb38] sm:$0xff]
    %v453 = vld [vmem:[#allocation8 + $0xb40] sm:$0xff]
    %v454 = vld [vmem:[#allocation8 + $0xb48] sm:$0xff]
    %v455 = vld [vmem:[#allocation8 + $0xb50] sm:$0xff]
    %v456 = vld [vmem:[#allocation8 + $0xb58] sm:$0xff]
    %v457 = vld [vmem:[#allocation8 + $0xb60] sm:$0xff]
    %v458 = vld [vmem:[#allocation8 + $0xb68] sm:$0xff]
    %v459 = vld [vmem:[#allocation8 + $0xb70] sm:$0xff]
    %v460 = vld [vmem:[#allocation8 + $0xb78] sm:$0xff]
    %v461 = vld [vmem:[#allocation8 + $0xb80] sm:$0xff]
    %v462 = vld [vmem:[#allocation8 + $0xb88] sm:$0xff]
    %v463 = vld [vmem:[#allocation8 + $0xb90] sm:$0xff]
    %v464 = vld [vmem:[#allocation8 + $0xb98] sm:$0xff]
    %v465 = vld [vmem:[#allocation8 + $0xba0] sm:$0xff]
    %v466 = vld [vmem:[#allocation8 + $0xba8] sm:$0xff]
    %v467 = vld [vmem:[#allocation8 + $0xbb0] sm:$0xff]
    %v468 = vld [vmem:[#allocation8 + $0xbb8] sm:$0xff]
    %v469 = vld [vmem:[#allocation8 + $0xbc0] sm:$0xff]
    %v470 = vld [vmem:[#allocation8 + $0xbc8] sm:$0xff]
    %v471 = vld [vmem:[#allocation8 + $0xbd0] sm:$0xff]
    %v472 = vld [vmem:[#allocation8 + $0xbd8] sm:$0xff]
    %v473 = vld [vmem:[#allocation8 + $0xbe0] sm:$0xff]
    %v474 = vld [vmem:[#allocation8 + $0xbe8] sm:$0xff]
    %v475 = vld [vmem:[#allocation8 + $0xbf0] sm:$0xff]
    %v476 = vld [vmem:[#allocation8 + $0xbf8] sm:$0xff]
    %v477 = vld [vmem:[#allocation8 + $0xc00] sm:$0xff]
    %v478 = vld [vmem:[#allocation8 + $0xc08] sm:$0xff]
    %v479 = vld [vmem:[#allocation8 + $0xc10] sm:$0xff]
    %v480 = vld [vmem:[#allocation8 + $0xc18] sm:$0xff]
    %v481 = vld [vmem:[#allocation8 + $0xc20] sm:$0xff]
    %v482 = vld [vmem:[#allocation8 + $0xc28] sm:$0xff]
    %v483 = vld [vmem:[#allocation8 + $0xc30] sm:$0xff]
    %v484 = vld [vmem:[#allocation8 + $0xc38] sm:$0xff]
    %v485 = vld [vmem:[#allocation8 + $0xc40] sm:$0xff]
    %v486 = vld [vmem:[#allocation8 + $0xc48] sm:$0xff]
    %v487 = vld [vmem:[#allocation8 + $0xc50] sm:$0xff]
    %v488 = vld [vmem:[#allocation8 + $0xc58] sm:$0xff]
    %v489 = vld [vmem:[#allocation8 + $0xc60] sm:$0xff]
    %v490 = vld [vmem:[#allocation8 + $0xc68] sm:$0xff]
    %v491 = vld [vmem:[#allocation8 + $0xc70] sm:$0xff]
    %v492 = vld [vmem:[#allocation8 + $0xc78] sm:$0xff]
    %v493 = vld [vmem:[#allocation8 + $0xc80] sm:$0xff]
    %v494 = vld [vmem:[#allocation8 + $0xc88] sm:$0xff]
    %v495 = vld [vmem:[#allocation8 + $0xc90] sm:$0xff]
    %v496 = vld [vmem:[#allocation8 + $0xc98] sm:$0xff]
    %v497 = vld [vmem:[#allocation8 + $0xca0] sm:$0xff]
    %v498 = vld [vmem:[#allocation8 + $0xca8] sm:$0xff]
    %v499 = vld [vmem:[#allocation8 + $0xcb0] sm:$0xff]
    %v500 = vld [vmem:[#allocation8 + $0xcb8] sm:$0xff]
    %v501 = vld [vmem:[#allocation8 + $0xcc0] sm:$0xff]
    %v502 = vld [vmem:[#allocation8 + $0xcc8] sm:$0xff]
    %v503 = vld [vmem:[#allocation8 + $0xcd0] sm:$0xff]
    %v504 = vld [vmem:[#allocation8 + $0xcd8] sm:$0xff]
    %v505 = vld [vmem:[#allocation8 + $0xce0] sm:$0xff]
    %v506 = vld [vmem:[#allocation8 + $0xce8] sm:$0xff]
    %v507 = vld [vmem:[#allocation8 + $0xcf0] sm:$0xff]
    %v508 = vld [vmem:[#allocation8 + $0xcf8] sm:$0xff]
    %v509 = vld [vmem:[#allocation8 + $0xd00] sm:$0xff]
    %v510 = vld [vmem:[#allocation8 + $0xd08] sm:$0xff]
    %v511 = vld [vmem:[#allocation8 + $0xd10] sm:$0xff]
    %v512 = vld [vmem:[#allocation8 + $0xd18] sm:$0xff]
    %v513 = vld [vmem:[#allocation8 + $0xd20] sm:$0xff]
    %v514 = vld [vmem:[#allocation8 + $0xd28] sm:$0xff]
    %v515 = vld [vmem:[#allocation8 + $0xd30] sm:$0xff]
    %v516 = vld [vmem:[#allocation8 + $0xd38] sm:$0xff]
    %v517 = vld [vmem:[#allocation8 + $0xd40] sm:$0xff]
    %v518 = vld [vmem:[#allocation8 + $0xd48] sm:$0xff]
    %v519 = vld [vmem:[#allocation8 + $0xd50] sm:$0xff]
    %v520 = vld [vmem:[#allocation8 + $0xd58] sm:$0xff]
    %v521 = vld [vmem:[#allocation8 + $0xd60] sm:$0xff]
    %v522 = vld [vmem:[#allocation8 + $0xd68] sm:$0xff]
    %v523 = vld [vmem:[#allocation8 + $0xd70] sm:$0xff]
    %v524 = vld [vmem:[#allocation8 + $0xd78] sm:$0xff]
    %v525 = vld [vmem:[#allocation8 + $0xd80] sm:$0xff]
    %v526 = vld [vmem:[#allocation8 + $0xd88] sm:$0xff]
    %v527 = vld [vmem:[#allocation8 + $0xd90] sm:$0xff]
    %v528 = vld [vmem:[#allocation8 + $0xd98] sm:$0xff]
    %v529 = vld [vmem:[#allocation8 + $0xda0] sm:$0xff]
    %v530 = vld [vmem:[#allocation8 + $0xda8] sm:$0xff]
    %v531 = vld [vmem:[#allocation8 + $0xdb0] sm:$0xff]
    %v532 = vld [vmem:[#allocation8 + $0xdb8] sm:$0xff]
    %v533 = vld [vmem:[#allocation8 + $0xdc0] sm:$0xff]
    %v534 = vld [vmem:[#allocation8 + $0xdc8] sm:$0xff]
    %v535 = vld [vmem:[#allocation8 + $0xdd0] sm:$0xff]
    %v536 = vld [vmem:[#allocation8 + $0xdd8] sm:$0xff]
    %v537 = vld [vmem:[#allocation8 + $0xde0] sm:$0xff]
    %v538 = vld [vmem:[#allocation8 + $0xde8] sm:$0xff]
    %v539 = vld [vmem:[#allocation8 + $0xdf0] sm:$0xff]
    %v540 = vld [vmem:[#allocation8 + $0xdf8] sm:$0xff]
    %v541 = vld [vmem:[#allocation8 + $0xe00] sm:$0xff]
    %v542 = vld [vmem:[#allocation8 + $0xe08] sm:$0xff]
    %v543 = vld [vmem:[#allocation8 + $0xe10] sm:$0xff]
    %v544 = vld [vmem:[#allocation8 + $0xe18] sm:$0xff]
    %v545 = vld [vmem:[#allocation8 + $0xe20] sm:$0xff]
    %v546 = vld [vmem:[#allocation8 + $0xe28] sm:$0xff]
    %v547 = vld [vmem:[#allocation8 + $0xe30] sm:$0xff]
    %v548 = vld [vmem:[#allocation8 + $0xe38] sm:$0xff]
    %v549 = vld [vmem:[#allocation8 + $0xe40] sm:$0xff]
    %v550 = vld [vmem:[#allocation8 + $0xe48] sm:$0xff]
    %v551 = vld [vmem:[#allocation8 + $0xe50] sm:$0xff]
    %v552 = vld [vmem:[#allocation8 + $0xe58] sm:$0xff]
    %v553 = vld [vmem:[#allocation8 + $0xe60] sm:$0xff]
    %v554 = vld [vmem:[#allocation8 + $0xe68] sm:$0xff]
    %v555 = vld [vmem:[#allocation8 + $0xe70] sm:$0xff]
    %v556 = vld [vmem:[#allocation8 + $0xe78] sm:$0xff]
    %v557 = vld [vmem:[#allocation8 + $0xe80] sm:$0xff]
    %v558 = vld [vmem:[#allocation8 + $0xe88] sm:$0xff]
    %v559 = vld [vmem:[#allocation8 + $0xe90] sm:$0xff]
    %v560 = vld [vmem:[#allocation8 + $0xe98] sm:$0xff]
    %v561 = vld [vmem:[#allocation8 + $0xea0] sm:$0xff]
    %v562 = vld [vmem:[#allocation8 + $0xea8] sm:$0xff]
    %v563 = vld [vmem:[#allocation8 + $0xeb0] sm:$0xff]
    %v564 = vld [vmem:[#allocation8 + $0xeb8] sm:$0xff]
    %v565 = vld [vmem:[#allocation8 + $0xec0] sm:$0xff]
    %v566 = vld [vmem:[#allocation8 + $0xec8] sm:$0xff]
    %v567 = vld [vmem:[#allocation8 + $0xed0] sm:$0xff]
    %v568 = vld [vmem:[#allocation8 + $0xed8] sm:$0xff]
    %v569 = vld [vmem:[#allocation8 + $0xee0] sm:$0xff]
    %v570 = vld [vmem:[#allocation8 + $0xee8] sm:$0xff]
    %v571 = vld [vmem:[#allocation8 + $0xef0] sm:$0xff]
    %v572 = vld [vmem:[#allocation8 + $0xef8] sm:$0xff]
    %v573 = vld [vmem:[#allocation8 + $0xf00] sm:$0xff]
    %v574 = vld [vmem:[#allocation8 + $0xf08] sm:$0xff]
    %v575 = vld [vmem:[#allocation8 + $0xf10] sm:$0xff]
    %v576 = vld [vmem:[#allocation8 + $0xf18] sm:$0xff]
    %v577 = vld [vmem:[#allocation8 + $0xf20] sm:$0xff]
    %v578 = vld [vmem:[#allocation8 + $0xf28] sm:$0xff]
    %v579 = vld [vmem:[#allocation8 + $0xf30] sm:$0xff]
    %v580 = vld [vmem:[#allocation8 + $0xf38] sm:$0xff]
    %v581 = vld [vmem:[#allocation8 + $0xf40] sm:$0xff]
    %v582 = vld [vmem:[#allocation8 + $0xf48] sm:$0xff]
    %v583 = vld [vmem:[#allocation8 + $0xf50] sm:$0xff]
    %v584 = vld [vmem:[#allocation8 + $0xf58] sm:$0xff]
    %v585 = vld [vmem:[#allocation8 + $0xf60] sm:$0xff]
    %v586 = vld [vmem:[#allocation8 + $0xf68] sm:$0xff]
    %v587 = vld [vmem:[#allocation8 + $0xf70] sm:$0xff]
    %v588 = vld [vmem:[#allocation8 + $0xf78] sm:$0xff]
    %v589 = vld [vmem:[#allocation8 + $0xf80] sm:$0xff]
    %v590 = vld [vmem:[#allocation8 + $0xf88] sm:$0xff]
    %v591 = vld [vmem:[#allocation8 + $0xf90] sm:$0xff]
    %v592 = vld [vmem:[#allocation8 + $0xf98] sm:$0xff]
    %v593 = vld [vmem:[#allocation8 + $0xfa0] sm:$0xff]
    %v594 = vld [vmem:[#allocation8 + $0xfa8] sm:$0xff]
    %v595 = vld [vmem:[#allocation8 + $0xfb0] sm:$0xff]
    %v596 = vld [vmem:[#allocation8 + $0xfb8] sm:$0xff]
    %v597 = vld [vmem:[#allocation8 + $0xfc0] sm:$0xff]
    %v598 = vld [vmem:[#allocation8 + $0xfc8] sm:$0xff]
    %v599 = vld [vmem:[#allocation8 + $0xfd0] sm:$0xff]
    %v600 = vld [vmem:[#allocation8 + $0xfd8] sm:$0xff]
    %v601 = vld [vmem:[#allocation8 + $0xfe0] sm:$0xff]
    %v602 = vld [vmem:[#allocation8 + $0xfe8] sm:$0xff]
    %v603 = vld [vmem:[#allocation8 + $0xff0] sm:$0xff]
    %v604 = vld [vmem:[#allocation8 + $0xff8] sm:$0xff]
    %v605 = vld [vmem:[#allocation10] sm:$0xff]
    %v606 = vld [vmem:[#allocation10 + $0x8] sm:$0xff]
    %v607 = vld [vmem:[#allocation10 + $0x10] sm:$0xff]
    %v608 = vld [vmem:[#allocation10 + $0x18] sm:$0xff]
    %v609 = vld [vmem:[#allocation10 + $0x20] sm:$0xff]
    %v610 = vld [vmem:[#allocation10 + $0x28] sm:$0xff]
    %v611 = vld [vmem:[#allocation10 + $0x30] sm:$0xff]
    %v612 = vld [vmem:[#allocation10 + $0x38] sm:$0xff]
    %v613 = vld [vmem:[#allocation10 + $0x40] sm:$0xff]
    %v614 = vld [vmem:[#allocation10 + $0x48] sm:$0xff]
    %v615 = vld [vmem:[#allocation10 + $0x50] sm:$0xff]
    %v616 = vld [vmem:[#allocation10 + $0x58] sm:$0xff]
    %v617 = vld [vmem:[#allocation10 + $0x60] sm:$0xff]
    %v618 = vld [vmem:[#allocation10 + $0x68] sm:$0xff]
    %v619 = vld [vmem:[#allocation10 + $0x70] sm:$0xff]
    %v620 = vld [vmem:[#allocation10 + $0x78] sm:$0xff]
    %v621 = vld [vmem:[#allocation10 + $0x80] sm:$0xff]
    %v622 = vld [vmem:[#allocation10 + $0x88] sm:$0xff]
    %v623 = vld [vmem:[#allocation10 + $0x90] sm:$0xff]
    %v624 = vld [vmem:[#allocation10 + $0x98] sm:$0xff]
    %v625 = vld [vmem:[#allocation10 + $0xa0] sm:$0xff]
    %v626 = vld [vmem:[#allocation10 + $0xa8] sm:$0xff]
    %v627 = vld [vmem:[#allocation10 + $0xb0] sm:$0xff]
    %v628 = vld [vmem:[#allocation10 + $0xb8] sm:$0xff]
    %v629 = vld [vmem:[#allocation10 + $0xc0] sm:$0xff]
    %v630 = vld [vmem:[#allocation10 + $0xc8] sm:$0xff]
    %v631 = vld [vmem:[#allocation10 + $0xd0] sm:$0xff]
    %v632 = vld [vmem:[#allocation10 + $0xd8] sm:$0xff]
    %v633 = vld [vmem:[#allocation10 + $0xe0] sm:$0xff]
    %v634 = vld [vmem:[#allocation10 + $0xe8] sm:$0xff]
    %v635 = vld [vmem:[#allocation10 + $0xf0] sm:$0xff]
    %v636 = vld [vmem:[#allocation10 + $0xf8] sm:$0xff]
    %v637 = vld [vmem:[#allocation10 + $0x100] sm:$0xff]
    %v638 = vld [vmem:[#allocation10 + $0x108] sm:$0xff]
    %v639 = vld [vmem:[#allocation10 + $0x110] sm:$0xff]
    %v640 = vld [vmem:[#allocation10 + $0x118] sm:$0xff]
    %v641 = vld [vmem:[#allocation10 + $0x120] sm:$0xff]
    %v642 = vld [vmem:[#allocation10 + $0x128] sm:$0xff]
    %v643 = vld [vmem:[#allocation10 + $0x130] sm:$0xff]
    %v644 = vld [vmem:[#allocation10 + $0x138] sm:$0xff]
    %v645 = vld [vmem:[#allocation10 + $0x140] sm:$0xff]
    %v646 = vld [vmem:[#allocation10 + $0x148] sm:$0xff]
    %v647 = vld [vmem:[#allocation10 + $0x150] sm:$0xff]
    %v648 = vld [vmem:[#allocation10 + $0x158] sm:$0xff]
    %v649 = vld [vmem:[#allocation10 + $0x160] sm:$0xff]
    %v650 = vld [vmem:[#allocation10 + $0x168] sm:$0xff]
    %v651 = vld [vmem:[#allocation10 + $0x170] sm:$0xff]
    %v652 = vld [vmem:[#allocation10 + $0x178] sm:$0xff]
    %v653 = vld [vmem:[#allocation10 + $0x180] sm:$0xff]
    %v654 = vld [vmem:[#allocation10 + $0x188] sm:$0xff]
    %v655 = vld [vmem:[#allocation10 + $0x190] sm:$0xff]
    %v656 = vld [vmem:[#allocation10 + $0x198] sm:$0xff]
    %v657 = vld [vmem:[#allocation10 + $0x1a0] sm:$0xff]
    %v658 = vld [vmem:[#allocation10 + $0x1a8] sm:$0xff]
    %v659 = vld [vmem:[#allocation10 + $0x1b0] sm:$0xff]
    %v660 = vld [vmem:[#allocation10 + $0x1b8] sm:$0xff]
    %v661 = vld [vmem:[#allocation10 + $0x1c0] sm:$0xff]
    %v662 = vld [vmem:[#allocation10 + $0x1c8] sm:$0xff]
    %v663 = vld [vmem:[#allocation10 + $0x1d0] sm:$0xff]
    %v664 = vld [vmem:[#allocation10 + $0x1d8] sm:$0xff]
    %v665 = vld [vmem:[#allocation10 + $0x1e0] sm:$0xff]
    %v666 = vld [vmem:[#allocation10 + $0x1e8] sm:$0xff]
    %v667 = vld [vmem:[#allocation10 + $0x1f0] sm:$0xff]
    %v668 = vld [vmem:[#allocation10 + $0x1f8] sm:$0xff]
    %v669 = vld [vmem:[#allocation10 + $0x200] sm:$0xff]
    %v670 = vld [vmem:[#allocation10 + $0x208] sm:$0xff]
    %v671 = vld [vmem:[#allocation10 + $0x210] sm:$0xff]
    %v672 = vld [vmem:[#allocation10 + $0x218] sm:$0xff]
    %v673 = vld [vmem:[#allocation10 + $0x220] sm:$0xff]
    %v674 = vld [vmem:[#allocation10 + $0x228] sm:$0xff]
    %v675 = vld [vmem:[#allocation10 + $0x230] sm:$0xff]
    %v676 = vld [vmem:[#allocation10 + $0x238] sm:$0xff]
    %v677 = vld [vmem:[#allocation10 + $0x240] sm:$0xff]
    %v678 = vld [vmem:[#allocation10 + $0x248] sm:$0xff]
    %v679 = vld [vmem:[#allocation10 + $0x250] sm:$0xff]
    %v680 = vld [vmem:[#allocation10 + $0x258] sm:$0xff]
    %v681 = vld [vmem:[#allocation10 + $0x260] sm:$0xff]
    %v682 = vld [vmem:[#allocation10 + $0x268] sm:$0xff]
    %v683 = vld [vmem:[#allocation10 + $0x270] sm:$0xff]
    %v684 = vld [vmem:[#allocation10 + $0x278] sm:$0xff]
    %v685 = vld [vmem:[#allocation10 + $0x280] sm:$0xff]
    %v686 = vld [vmem:[#allocation10 + $0x288] sm:$0xff]
    %v687 = vld [vmem:[#allocation10 + $0x290] sm:$0xff]
    %v688 = vld [vmem:[#allocation10 + $0x298] sm:$0xff]
    %v689 = vld [vmem:[#allocation10 + $0x2a0] sm:$0xff]
    %v690 = vld [vmem:[#allocation10 + $0x2a8] sm:$0xff]
    %v691 = vld [vmem:[#allocation10 + $0x2b0] sm:$0xff]
    %v692 = vld [vmem:[#allocation10 + $0x2b8] sm:$0xff]
    %v693 = vld [vmem:[#allocation10 + $0x2c0] sm:$0xff]
    %v694 = vld [vmem:[#allocation10 + $0x2c8] sm:$0xff]
    %v695 = vld [vmem:[#allocation10 + $0x2d0] sm:$0xff]
    %v696 = vld [vmem:[#allocation10 + $0x2d8] sm:$0xff]
    %v697 = vld [vmem:[#allocation10 + $0x2e0] sm:$0xff]
    %v698 = vld [vmem:[#allocation10 + $0x2e8] sm:$0xff]
    %v699 = vld [vmem:[#allocation10 + $0x2f0] sm:$0xff]
    %v700 = vld [vmem:[#allocation10 + $0x2f8] sm:$0xff]
    %v701 = vld [vmem:[#allocation10 + $0x300] sm:$0xff]
    %v702 = vld [vmem:[#allocation10 + $0x308] sm:$0xff]
    %v703 = vld [vmem:[#allocation10 + $0x310] sm:$0xff]
    %v704 = vld [vmem:[#allocation10 + $0x318] sm:$0xff]
    %v705 = vld [vmem:[#allocation10 + $0x320] sm:$0xff]
    %v706 = vld [vmem:[#allocation10 + $0x328] sm:$0xff]
    %v707 = vld [vmem:[#allocation10 + $0x330] sm:$0xff]
    %v708 = vld [vmem:[#allocation10 + $0x338] sm:$0xff]
    %v709 = vld [vmem:[#allocation10 + $0x340] sm:$0xff]
    %v710 = vld [vmem:[#allocation10 + $0x348] sm:$0xff]
    %v711 = vld [vmem:[#allocation10 + $0x350] sm:$0xff]
    %v712 = vld [vmem:[#allocation10 + $0x358] sm:$0xff]
    %v713 = vld [vmem:[#allocation10 + $0x360] sm:$0xff]
    %v714 = vld [vmem:[#allocation10 + $0x368] sm:$0xff]
    %v715 = vld [vmem:[#allocation10 + $0x370] sm:$0xff]
    %v716 = vld [vmem:[#allocation10 + $0x378] sm:$0xff]
    %v717 = vld [vmem:[#allocation10 + $0x380] sm:$0xff]
    %v718 = vld [vmem:[#allocation10 + $0x388] sm:$0xff]
    %v719 = vld [vmem:[#allocation10 + $0x390] sm:$0xff]
    %v720 = vld [vmem:[#allocation10 + $0x398] sm:$0xff]
    %v721 = vld [vmem:[#allocation10 + $0x3a0] sm:$0xff]
    %v722 = vld [vmem:[#allocation10 + $0x3a8] sm:$0xff]
    %v723 = vld [vmem:[#allocation10 + $0x3b0] sm:$0xff]
    %v724 = vld [vmem:[#allocation10 + $0x3b8] sm:$0xff]
    %v725 = vld [vmem:[#allocation10 + $0x3c0] sm:$0xff]
    %v726 = vld [vmem:[#allocation10 + $0x3c8] sm:$0xff]
    %v727 = vld [vmem:[#allocation10 + $0x3d0] sm:$0xff]
    %v728 = vld [vmem:[#allocation10 + $0x3d8] sm:$0xff]
    %v729 = vld [vmem:[#allocation10 + $0x3e0] sm:$0xff]
    %v730 = vld [vmem:[#allocation10 + $0x3e8] sm:$0xff]
    %v731 = vld [vmem:[#allocation10 + $0x3f0] sm:$0xff]
    %v732 = vld [vmem:[#allocation10 + $0x3f8] sm:$0xff]
    %v733 = vld [vmem:[#allocation10 + $0x400] sm:$0xff]
    %v734 = vld [vmem:[#allocation10 + $0x408] sm:$0xff]
    %v735 = vld [vmem:[#allocation10 + $0x410] sm:$0xff]
    %v736 = vld [vmem:[#allocation10 + $0x418] sm:$0xff]
    %v737 = vld [vmem:[#allocation10 + $0x420] sm:$0xff]
    %v738 = vld [vmem:[#allocation10 + $0x428] sm:$0xff]
    %v739 = vld [vmem:[#allocation10 + $0x430] sm:$0xff]
    %v740 = vld [vmem:[#allocation10 + $0x438] sm:$0xff]
    %v741 = vld [vmem:[#allocation10 + $0x440] sm:$0xff]
    %v742 = vld [vmem:[#allocation10 + $0x448] sm:$0xff]
    %v743 = vld [vmem:[#allocation10 + $0x450] sm:$0xff]
    %v744 = vld [vmem:[#allocation10 + $0x458] sm:$0xff]
    %v745 = vld [vmem:[#allocation10 + $0x460] sm:$0xff]
    %v746 = vld [vmem:[#allocation10 + $0x468] sm:$0xff]
    %v747 = vld [vmem:[#allocation10 + $0x470] sm:$0xff]
    %v748 = vld [vmem:[#allocation10 + $0x478] sm:$0xff]
    %v749 = vld [vmem:[#allocation10 + $0x480] sm:$0xff]
    %v750 = vld [vmem:[#allocation10 + $0x488] sm:$0xff]
    %v751 = vld [vmem:[#allocation10 + $0x490] sm:$0xff]
    %v752 = vld [vmem:[#allocation10 + $0x498] sm:$0xff]
    %v753 = vld [vmem:[#allocation10 + $0x4a0] sm:$0xff]
    %v754 = vld [vmem:[#allocation10 + $0x4a8] sm:$0xff]
    %v755 = vld [vmem:[#allocation10 + $0x4b0] sm:$0xff]
    %v756 = vld [vmem:[#allocation10 + $0x4b8] sm:$0xff]
    %v757 = vld [vmem:[#allocation10 + $0x4c0] sm:$0xff]
    %v758 = vld [vmem:[#allocation10 + $0x4c8] sm:$0xff]
    %v759 = vld [vmem:[#allocation10 + $0x4d0] sm:$0xff]
    %v760 = vld [vmem:[#allocation10 + $0x4d8] sm:$0xff]
    %v761 = vld [vmem:[#allocation10 + $0x4e0] sm:$0xff]
    %v762 = vld [vmem:[#allocation10 + $0x4e8] sm:$0xff]
    %v763 = vld [vmem:[#allocation10 + $0x4f0] sm:$0xff]
    %v764 = vld [vmem:[#allocation10 + $0x4f8] sm:$0xff]
    %v765 = vld [vmem:[#allocation10 + $0x500] sm:$0xff]
    %v766 = vld [vmem:[#allocation10 + $0x508] sm:$0xff]
    %v767 = vld [vmem:[#allocation10 + $0x510] sm:$0xff]
    %v768 = vld [vmem:[#allocation10 + $0x518] sm:$0xff]
    %v769 = vld [vmem:[#allocation10 + $0x520] sm:$0xff]
    %v770 = vld [vmem:[#allocation10 + $0x528] sm:$0xff]
    %v771 = vld [vmem:[#allocation10 + $0x530] sm:$0xff]
    %v772 = vld [vmem:[#allocation10 + $0x538] sm:$0xff]
    %v773 = vld [vmem:[#allocation10 + $0x540] sm:$0xff]
    %v774 = vld [vmem:[#allocation10 + $0x548] sm:$0xff]
    %v775 = vld [vmem:[#allocation10 + $0x550] sm:$0xff]
    %v776 = vld [vmem:[#allocation10 + $0x558] sm:$0xff]
    %v777 = vld [vmem:[#allocation10 + $0x560] sm:$0xff]
    %v778 = vld [vmem:[#allocation10 + $0x568] sm:$0xff]
    %v779 = vld [vmem:[#allocation10 + $0x570] sm:$0xff]
    %v780 = vld [vmem:[#allocation10 + $0x578] sm:$0xff]
    %v781 = vld [vmem:[#allocation10 + $0x580] sm:$0xff]
    %v782 = vld [vmem:[#allocation10 + $0x588] sm:$0xff]
    %v783 = vld [vmem:[#allocation10 + $0x590] sm:$0xff]
    %v784 = vld [vmem:[#allocation10 + $0x598] sm:$0xff]
    %v785 = vld [vmem:[#allocation10 + $0x5a0] sm:$0xff]
    %v786 = vld [vmem:[#allocation10 + $0x5a8] sm:$0xff]
    %v787 = vld [vmem:[#allocation10 + $0x5b0] sm:$0xff]
    %v788 = vld [vmem:[#allocation10 + $0x5b8] sm:$0xff]
    %v789 = vld [vmem:[#allocation10 + $0x5c0] sm:$0xff]
    %v790 = vld [vmem:[#allocation10 + $0x5c8] sm:$0xff]
    %v791 = vld [vmem:[#allocation10 + $0x5d0] sm:$0xff]
    %v792 = vld [vmem:[#allocation10 + $0x5d8] sm:$0xff]
    %v793 = vld [vmem:[#allocation10 + $0x5e0] sm:$0xff]
    %v794 = vld [vmem:[#allocation10 + $0x5e8] sm:$0xff]
    %v795 = vld [vmem:[#allocation10 + $0x5f0] sm:$0xff]
    %v796 = vld [vmem:[#allocation10 + $0x5f8] sm:$0xff]
    %v797 = vld [vmem:[#allocation10 + $0x600] sm:$0xff]
    %v798 = vld [vmem:[#allocation10 + $0x608] sm:$0xff]
    %v799 = vld [vmem:[#allocation10 + $0x610] sm:$0xff]
    %v800 = vld [vmem:[#allocation10 + $0x618] sm:$0xff]
    %v801 = vld [vmem:[#allocation10 + $0x620] sm:$0xff]
    %v802 = vld [vmem:[#allocation10 + $0x628] sm:$0xff]
    %v803 = vld [vmem:[#allocation10 + $0x630] sm:$0xff]
    %v804 = vld [vmem:[#allocation10 + $0x638] sm:$0xff]
    %v805 = vld [vmem:[#allocation10 + $0x640] sm:$0xff]
    %v806 = vld [vmem:[#allocation10 + $0x648] sm:$0xff]
    %v807 = vld [vmem:[#allocation10 + $0x650] sm:$0xff]
    %v808 = vld [vmem:[#allocation10 + $0x658] sm:$0xff]
    %v809 = vld [vmem:[#allocation10 + $0x660] sm:$0xff]
    %v810 = vld [vmem:[#allocation10 + $0x668] sm:$0xff]
    %v811 = vld [vmem:[#allocation10 + $0x670] sm:$0xff]
    %v812 = vld [vmem:[#allocation10 + $0x678] sm:$0xff]
    %v813 = vld [vmem:[#allocation10 + $0x680] sm:$0xff]
    %v814 = vld [vmem:[#allocation10 + $0x688] sm:$0xff]
    %v815 = vld [vmem:[#allocation10 + $0x690] sm:$0xff]
    %v816 = vld [vmem:[#allocation10 + $0x698] sm:$0xff]
    %v817 = vld [vmem:[#allocation10 + $0x6a0] sm:$0xff]
    %v818 = vld [vmem:[#allocation10 + $0x6a8] sm:$0xff]
    %v819 = vld [vmem:[#allocation10 + $0x6b0] sm:$0xff]
    %v820 = vld [vmem:[#allocation10 + $0x6b8] sm:$0xff]
    %v821 = vld [vmem:[#allocation10 + $0x6c0] sm:$0xff]
    %v822 = vld [vmem:[#allocation10 + $0x6c8] sm:$0xff]
    %v823 = vld [vmem:[#allocation10 + $0x6d0] sm:$0xff]
    %v824 = vld [vmem:[#allocation10 + $0x6d8] sm:$0xff]
    %v825 = vld [vmem:[#allocation10 + $0x6e0] sm:$0xff]
    %v826 = vld [vmem:[#allocation10 + $0x6e8] sm:$0xff]
    %v827 = vld [vmem:[#allocation10 + $0x6f0] sm:$0xff]
    %v828 = vld [vmem:[#allocation10 + $0x6f8] sm:$0xff]
    %v829 = vld [vmem:[#allocation10 + $0x700] sm:$0xff]
    %v830 = vld [vmem:[#allocation10 + $0x708] sm:$0xff]
    %v831 = vld [vmem:[#allocation10 + $0x710] sm:$0xff]
    %v832 = vld [vmem:[#allocation10 + $0x718] sm:$0xff]
    %v833 = vld [vmem:[#allocation10 + $0x720] sm:$0xff]
    %v834 = vld [vmem:[#allocation10 + $0x728] sm:$0xff]
    %v835 = vld [vmem:[#allocation10 + $0x730] sm:$0xff]
    %v836 = vld [vmem:[#allocation10 + $0x738] sm:$0xff]
    %v837 = vld [vmem:[#allocation10 + $0x740] sm:$0xff]
    %v838 = vld [vmem:[#allocation10 + $0x748] sm:$0xff]
    %v839 = vld [vmem:[#allocation10 + $0x750] sm:$0xff]
    %v840 = vld [vmem:[#allocation10 + $0x758] sm:$0xff]
    %v841 = vld [vmem:[#allocation10 + $0x760] sm:$0xff]
    %v842 = vld [vmem:[#allocation10 + $0x768] sm:$0xff]
    %v843 = vld [vmem:[#allocation10 + $0x770] sm:$0xff]
    %v844 = vld [vmem:[#allocation10 + $0x778] sm:$0xff]
    %v845 = vld [vmem:[#allocation10 + $0x780] sm:$0xff]
    %v846 = vld [vmem:[#allocation10 + $0x788] sm:$0xff]
    %v847 = vld [vmem:[#allocation10 + $0x790] sm:$0xff]
    %v848 = vld [vmem:[#allocation10 + $0x798] sm:$0xff]
    %v849 = vld [vmem:[#allocation10 + $0x7a0] sm:$0xff]
    %v850 = vld [vmem:[#allocation10 + $0x7a8] sm:$0xff]
    %v851 = vld [vmem:[#allocation10 + $0x7b0] sm:$0xff]
    %v852 = vld [vmem:[#allocation10 + $0x7b8] sm:$0xff]
    %v853 = vld [vmem:[#allocation10 + $0x7c0] sm:$0xff]
    %v854 = vld [vmem:[#allocation10 + $0x7c8] sm:$0xff]
    %v855 = vld [vmem:[#allocation10 + $0x7d0] sm:$0xff]
    %v856 = vld [vmem:[#allocation10 + $0x7d8] sm:$0xff]
    %v857 = vld [vmem:[#allocation10 + $0x7e0] sm:$0xff]
    %v858 = vld [vmem:[#allocation10 + $0x7e8] sm:$0xff]
    %v859 = vld [vmem:[#allocation10 + $0x7f0] sm:$0xff]
    %v860 = vld [vmem:[#allocation10 + $0x7f8] sm:$0xff]
    %v861 = vld [vmem:[#allocation2] sm:$0xff]
    %v862 = vld [vmem:[#allocation2 + $0x8] sm:$0xff]
    %v863 = vld [vmem:[#allocation2 + $0x10] sm:$0xff]
    %v864 = vld [vmem:[#allocation2 + $0x18] sm:$0xff]
    %v865 = vld [vmem:[#allocation2 + $0x20] sm:$0xff]
    %v866 = vld [vmem:[#allocation2 + $0x28] sm:$0xff]
    %v867 = vld [vmem:[#allocation2 + $0x30] sm:$0xff]
    %v868 = vld [vmem:[#allocation2 + $0x38] sm:$0xff]
    %v869 = vld [vmem:[#allocation5] sm:$0xff]
    %v870 = vld [vmem:[#allocation5 + $0x8] sm:$0xff]
    %v871 = vld [vmem:[#allocation5 + $0x10] sm:$0xff]
    %v872 = vld [vmem:[#allocation5 + $0x18] sm:$0xff]
    %873 = vmatpush.msra.mxu0 %v665
    %874 = vmatpush.msra.mxu0 %v661
    %875 = vmatpush.msra.mxu0 %v657
    %876 = vmatpush.msra.mxu0 %v653
    %877 = vmatpush.msra.mxu0 %v649
    %878 = vmatpush.msra.mxu0 %v645
    %879 = vmatpush.msra.mxu0 %v641
    %880 = vmatpush.msra.mxu0 %v637
    %881 = vmatpush.msra.mxu0 %v633
    %882 = vmatpush.msra.mxu0 %v629
    %883 = vmatpush.msra.mxu0 %v625
    %884 = vmatpush.msra.mxu0 %v621
    %885 = vmatpush.msra.mxu0 %v617
    %886 = vmatpush.msra.mxu0 %v613
    %887 = vmatpush.msra.mxu0 %v609
    %888 = vmatpush.msra.mxu0 %v605
    %889 = vmatmul.f32.gmra.mxu0 %v869
    %v890 = vpop.f32.mrf.mxu0
    %v891 = vadd.f32 0.0, %v890
    %892 = vdwg.mxu0
    %893 = vmatpush.msra.mxu0 %v729
    %894 = vmatpush.msra.mxu0 %v725
    %895 = vmatpush.msra.mxu0 %v721
    %896 = vmatpush.msra.mxu0 %v717
    %897 = vmatpush.msra.mxu0 %v713
    %898 = vmatpush.msra.mxu0 %v709
    %899 = vmatpush.msra.mxu0 %v705
    %900 = vmatpush.msra.mxu0 %v701
    %901 = vmatpush.msra.mxu0 %v697
    %902 = vmatpush.msra.mxu0 %v693
    %903 = vmatpush.msra.mxu0 %v689
    %904 = vmatpush.msra.mxu0 %v685
    %905 = vmatpush.msra.mxu0 %v681
    %906 = vmatpush.msra.mxu0 %v677
    %907 = vmatpush.msra.mxu0 %v673
    %908 = vmatpush.msra.mxu0 %v669
    %909 = vmatmul.f32.gmra.mxu0 %v870
    %v910 = vpop.f32.mrf.mxu0
    %v911 = vadd.f32 %v891, %v910
    %912 = vdwg.mxu0
    %913 = vmatpush.msra.mxu0 %v793
    %914 = vmatpush.msra.mxu0 %v789
    %915 = vmatpush.msra.mxu0 %v785
    %916 = vmatpush.msra.mxu0 %v781
    %917 = vmatpush.msra.mxu0 %v777
    %918 = vmatpush.msra.mxu0 %v773
    %919 = vmatpush.msra.mxu0 %v769
    %920 = vmatpush.msra.mxu0 %v765
    %921 = vmatpush.msra.mxu0 %v761
    %922 = vmatpush.msra.mxu0 %v757
    %923 = vmatpush.msra.mxu0 %v753
    %924 = vmatpush.msra.mxu0 %v749
    %925 = vmatpush.msra.mxu0 %v745
    %926 = vmatpush.msra.mxu0 %v741
    %927 = vmatpush.msra.mxu0 %v737
    %928 = vmatpush.msra.mxu0 %v733
    %929 = vmatmul.f32.gmra.mxu0 %v871
    %v930 = vpop.f32.mrf.mxu0
    %v931 = vadd.f32 %v911, %v930
    %932 = vdwg.mxu0
    %933 = vmatpush.msra.mxu0 %v857
    %934 = vmatpush.msra.mxu0 %v853
    %935 = vmatpush.msra.mxu0 %v849
    %936 = vmatpush.msra.mxu0 %v845
    %937 = vmatpush.msra.mxu0 %v841
    %938 = vmatpush.msra.mxu0 %v837
    %939 = vmatpush.msra.mxu0 %v833
    %940 = vmatpush.msra.mxu0 %v829
    %941 = vmatpush.msra.mxu0 %v825
    %942 = vmatpush.msra.mxu0 %v821
    %943 = vmatpush.msra.mxu0 %v817
    %944 = vmatpush.msra.mxu0 %v813
    %945 = vmatpush.msra.mxu0 %v809
    %946 = vmatpush.msra.mxu0 %v805
    %947 = vmatpush.msra.mxu0 %v801
    %948 = vmatpush.msra.mxu0 %v797
    %949 = vmatmul.f32.gmra.mxu0 %v872
    %v950 = vpop.f32.mrf.mxu0
    %v951 = vadd.f32 %v931, %v950
    %952 = vdwg.mxu0
    %953 = vmatpush.msra.mxu0 %v666
    %954 = vmatpush.msra.mxu0 %v662
    %955 = vmatpush.msra.mxu0 %v658
    %956 = vmatpush.msra.mxu0 %v654
    %957 = vmatpush.msra.mxu0 %v650
    %958 = vmatpush.msra.mxu0 %v646
    %959 = vmatpush.msra.mxu0 %v642
    %960 = vmatpush.msra.mxu0 %v638
    %961 = vmatpush.msra.mxu0 %v634
    %962 = vmatpush.msra.mxu0 %v630
    %963 = vmatpush.msra.mxu0 %v626
    %964 = vmatpush.msra.mxu0 %v622
    %965 = vmatpush.msra.mxu0 %v618
    %966 = vmatpush.msra.mxu0 %v614
    %967 = vmatpush.msra.mxu0 %v610
    %968 = vmatpush.msra.mxu0 %v606
    %969 = vmatmul.f32.gmra.mxu0 %v869
    %v970 = vpop.f32.mrf.mxu0
    %v971 = vadd.f32 0.0, %v970
    %972 = vdwg.mxu0
    %973 = vmatpush.msra.mxu0 %v730
    %974 = vmatpush.msra.mxu0 %v726
    %975 = vmatpush.msra.mxu0 %v722
    %976 = vmatpush.msra.mxu0 %v718
    %977 = vmatpush.msra.mxu0 %v714
    %978 = vmatpush.msra.mxu0 %v710
    %979 = vmatpush.msra.mxu0 %v706
    %980 = vmatpush.msra.mxu0 %v702
    %981 = vmatpush.msra.mxu0 %v698
    %982 = vmatpush.msra.mxu0 %v694
    %983 = vmatpush.msra.mxu0 %v690
    %984 = vmatpush.msra.mxu0 %v686
    %985 = vmatpush.msra.mxu0 %v682
    %986 = vmatpush.msra.mxu0 %v678
    %987 = vmatpush.msra.mxu0 %v674
    %988 = vmatpush.msra.mxu0 %v670
    %989 = vmatmul.f32.gmra.mxu0 %v870
    %v990 = vpop.f32.mrf.mxu0
    %v991 = vadd.f32 %v971, %v990
    %992 = vdwg.mxu0
    %993 = vmatpush.msra.mxu0 %v794
    %994 = vmatpush.msra.mxu0 %v790
    %995 = vmatpush.msra.mxu0 %v786
    %996 = vmatpush.msra.mxu0 %v782
    %997 = vmatpush.msra.mxu0 %v778
    %998 = vmatpush.msra.mxu0 %v774
    %999 = vmatpush.msra.mxu0 %v770
    %1000 = vmatpush.msra.mxu0 %v766
    %1001 = vmatpush.msra.mxu0 %v762
    %1002 = vmatpush.msra.mxu0 %v758
    %1003 = vmatpush.msra.mxu0 %v754
    %1004 = vmatpush.msra.mxu0 %v750
    %1005 = vmatpush.msra.mxu0 %v746
    %1006 = vmatpush.msra.mxu0 %v742
    %1007 = vmatpush.msra.mxu0 %v738
    %1008 = vmatpush.msra.mxu0 %v734
    %1009 = vmatmul.f32.gmra.mxu0 %v871
    %v1010 = vpop.f32.mrf.mxu0
    %v1011 = vadd.f32 %v991, %v1010
    %1012 = vdwg.mxu0
    %1013 = vmatpush.msra.mxu0 %v858
    %1014 = vmatpush.msra.mxu0 %v854
    %1015 = vmatpush.msra.mxu0 %v850
    %1016 = vmatpush.msra.mxu0 %v846
    %1017 = vmatpush.msra.mxu0 %v842
    %1018 = vmatpush.msra.mxu0 %v838
    %1019 = vmatpush.msra.mxu0 %v834
    %1020 = vmatpush.msra.mxu0 %v830
    %1021 = vmatpush.msra.mxu0 %v826
    %1022 = vmatpush.msra.mxu0 %v822
    %1023 = vmatpush.msra.mxu0 %v818
    %1024 = vmatpush.msra.mxu0 %v814
    %1025 = vmatpush.msra.mxu0 %v810
    %1026 = vmatpush.msra.mxu0 %v806
    %1027 = vmatpush.msra.mxu0 %v802
    %1028 = vmatpush.msra.mxu0 %v798
    %1029 = vmatmul.f32.gmra.mxu0 %v872
    %v1030 = vpop.f32.mrf.mxu0
    %v1031 = vadd.f32 %v1011, %v1030
    %1032 = vdwg.mxu0
    %1033 = vmatpush.msra.mxu0 %v667
    %1034 = vmatpush.msra.mxu0 %v663
    %1035 = vmatpush.msra.mxu0 %v659
    %1036 = vmatpush.msra.mxu0 %v655
    %1037 = vmatpush.msra.mxu0 %v651
    %1038 = vmatpush.msra.mxu0 %v647
    %1039 = vmatpush.msra.mxu0 %v643
    %1040 = vmatpush.msra.mxu0 %v639
    %1041 = vmatpush.msra.mxu0 %v635
    %1042 = vmatpush.msra.mxu0 %v631
    %1043 = vmatpush.msra.mxu0 %v627
    %1044 = vmatpush.msra.mxu0 %v623
    %1045 = vmatpush.msra.mxu0 %v619
    %1046 = vmatpush.msra.mxu0 %v615
    %1047 = vmatpush.msra.mxu0 %v611
    %1048 = vmatpush.msra.mxu0 %v607
    %1049 = vmatmul.f32.gmra.mxu0 %v869
    %v1050 = vpop.f32.mrf.mxu0
    %v1051 = vadd.f32 0.0, %v1050
    %1052 = vdwg.mxu0
    %1053 = vmatpush.msra.mxu0 %v731
    %1054 = vmatpush.msra.mxu0 %v727
    %1055 = vmatpush.msra.mxu0 %v723
    %1056 = vmatpush.msra.mxu0 %v719
    %1057 = vmatpush.msra.mxu0 %v715
    %1058 = vmatpush.msra.mxu0 %v711
    %1059 = vmatpush.msra.mxu0 %v707
    %1060 = vmatpush.msra.mxu0 %v703
    %1061 = vmatpush.msra.mxu0 %v699
    %1062 = vmatpush.msra.mxu0 %v695
    %1063 = vmatpush.msra.mxu0 %v691
    %1064 = vmatpush.msra.mxu0 %v687
    %1065 = vmatpush.msra.mxu0 %v683
    %1066 = vmatpush.msra.mxu0 %v679
    %1067 = vmatpush.msra.mxu0 %v675
    %1068 = vmatpush.msra.mxu0 %v671
    %1069 = vmatmul.f32.gmra.mxu0 %v870
    %v1070 = vpop.f32.mrf.mxu0
    %v1071 = vadd.f32 %v1051, %v1070
    %1072 = vdwg.mxu0
    %1073 = vmatpush.msra.mxu0 %v795
    %1074 = vmatpush.msra.mxu0 %v791
    %1075 = vmatpush.msra.mxu0 %v787
    %1076 = vmatpush.msra.mxu0 %v783
    %1077 = vmatpush.msra.mxu0 %v779
    %1078 = vmatpush.msra.mxu0 %v775
    %1079 = vmatpush.msra.mxu0 %v771
    %1080 = vmatpush.msra.mxu0 %v767
    %1081 = vmatpush.msra.mxu0 %v763
    %1082 = vmatpush.msra.mxu0 %v759
    %1083 = vmatpush.msra.mxu0 %v755
    %1084 = vmatpush.msra.mxu0 %v751
    %1085 = vmatpush.msra.mxu0 %v747
    %1086 = vmatpush.msra.mxu0 %v743
    %1087 = vmatpush.msra.mxu0 %v739
    %1088 = vmatpush.msra.mxu0 %v735
    %1089 = vmatmul.f32.gmra.mxu0 %v871
    %v1090 = vpop.f32.mrf.mxu0
    %v1091 = vadd.f32 %v1071, %v1090
    %1092 = vdwg.mxu0
    %1093 = vmatpush.msra.mxu0 %v859
    %1094 = vmatpush.msra.mxu0 %v855
    %1095 = vmatpush.msra.mxu0 %v851
    %1096 = vmatpush.msra.mxu0 %v847
    %1097 = vmatpush.msra.mxu0 %v843
    %1098 = vmatpush.msra.mxu0 %v839
    %1099 = vmatpush.msra.mxu0 %v835
    %1100 = vmatpush.msra.mxu0 %v831
    %1101 = vmatpush.msra.mxu0 %v827
    %1102 = vmatpush.msra.mxu0 %v823
    %1103 = vmatpush.msra.mxu0 %v819
    %1104 = vmatpush.msra.mxu0 %v815
    %1105 = vmatpush.msra.mxu0 %v811
    %1106 = vmatpush.msra.mxu0 %v807
    %1107 = vmatpush.msra.mxu0 %v803
    %1108 = vmatpush.msra.mxu0 %v799
    %1109 = vmatmul.f32.gmra.mxu0 %v872
    %v1110 = vpop.f32.mrf.mxu0
    %v1111 = vadd.f32 %v1091, %v1110
    %1112 = vdwg.mxu0
    %1113 = vmatpush.msra.mxu0 %v668
    %1114 = vmatpush.msra.mxu0 %v664
    %1115 = vmatpush.msra.mxu0 %v660
    %1116 = vmatpush.msra.mxu0 %v656
    %1117 = vmatpush.msra.mxu0 %v652
    %1118 = vmatpush.msra.mxu0 %v648
    %1119 = vmatpush.msra.mxu0 %v644
    %1120 = vmatpush.msra.mxu0 %v640
    %1121 = vmatpush.msra.mxu0 %v636
    %1122 = vmatpush.msra.mxu0 %v632
    %1123 = vmatpush.msra.mxu0 %v628
    %1124 = vmatpush.msra.mxu0 %v624
    %1125 = vmatpush.msra.mxu0 %v620
    %1126 = vmatpush.msra.mxu0 %v616
    %1127 = vmatpush.msra.mxu0 %v612
    %1128 = vmatpush.msra.mxu0 %v608
    %1129 = vmatmul.f32.gmra.mxu0 %v869
    %v1130 = vpop.f32.mrf.mxu0
    %v1131 = vadd.f32 0.0, %v1130
    %1132 = vdwg.mxu0
    %1133 = vmatpush.msra.mxu0 %v732
    %1134 = vmatpush.msra.mxu0 %v728
    %1135 = vmatpush.msra.mxu0 %v724
    %1136 = vmatpush.msra.mxu0 %v720
    %1137 = vmatpush.msra.mxu0 %v716
    %1138 = vmatpush.msra.mxu0 %v712
    %1139 = vmatpush.msra.mxu0 %v708
    %1140 = vmatpush.msra.mxu0 %v704
    %1141 = vmatpush.msra.mxu0 %v700
    %1142 = vmatpush.msra.mxu0 %v696
    %1143 = vmatpush.msra.mxu0 %v692
    %1144 = vmatpush.msra.mxu0 %v688
    %1145 = vmatpush.msra.mxu0 %v684
    %1146 = vmatpush.msra.mxu0 %v680
    %1147 = vmatpush.msra.mxu0 %v676
    %1148 = vmatpush.msra.mxu0 %v672
    %1149 = vmatmul.f32.gmra.mxu0 %v870
    %v1150 = vpop.f32.mrf.mxu0
    %v1151 = vadd.f32 %v1131, %v1150
    %1152 = vdwg.mxu0
    %1153 = vmatpush.msra.mxu0 %v796
    %1154 = vmatpush.msra.mxu0 %v792
    %1155 = vmatpush.msra.mxu0 %v788
    %1156 = vmatpush.msra.mxu0 %v784
    %1157 = vmatpush.msra.mxu0 %v780
    %1158 = vmatpush.msra.mxu0 %v776
    %1159 = vmatpush.msra.mxu0 %v772
    %1160 = vmatpush.msra.mxu0 %v768
    %1161 = vmatpush.msra.mxu0 %v764
    %1162 = vmatpush.msra.mxu0 %v760
    %1163 = vmatpush.msra.mxu0 %v756
    %1164 = vmatpush.msra.mxu0 %v752
    %1165 = vmatpush.msra.mxu0 %v748
    %1166 = vmatpush.msra.mxu0 %v744
    %1167 = vmatpush.msra.mxu0 %v740
    %1168 = vmatpush.msra.mxu0 %v736
    %1169 = vmatmul.f32.gmra.mxu0 %v871
    %v1170 = vpop.f32.mrf.mxu0
    %v1171 = vadd.f32 %v1151, %v1170
    %1172 = vdwg.mxu0
    %1173 = vmatpush.msra.mxu0 %v860
    %1174 = vmatpush.msra.mxu0 %v856
    %1175 = vmatpush.msra.mxu0 %v852
    %1176 = vmatpush.msra.mxu0 %v848
    %1177 = vmatpush.msra.mxu0 %v844
    %1178 = vmatpush.msra.mxu0 %v840
    %1179 = vmatpush.msra.mxu0 %v836
    %1180 = vmatpush.msra.mxu0 %v832
    %1181 = vmatpush.msra.mxu0 %v828
    %1182 = vmatpush.msra.mxu0 %v824
    %1183 = vmatpush.msra.mxu0 %v820
    %1184 = vmatpush.msra.mxu0 %v816
    %1185 = vmatpush.msra.mxu0 %v812
    %1186 = vmatpush.msra.mxu0 %v808
    %1187 = vmatpush.msra.mxu0 %v804
    %1188 = vmatpush.msra.mxu0 %v800
    %1189 = vmatmul.f32.gmra.mxu0 %v872
    %v1190 = vpop.f32.mrf.mxu0
    %v1191 = vadd.f32 %v1171, %v1190
    %1192 = vdwg.mxu0
    %1193 = vmatpush.msra.mxu0 %v153
    %1194 = vmatpush.msra.mxu0 %v149
    %1195 = vmatpush.msra.mxu0 %v145
    %1196 = vmatpush.msra.mxu0 %v141
    %1197 = vmatpush.msra.mxu0 %v137
    %1198 = vmatpush.msra.mxu0 %v133
    %1199 = vmatpush.msra.mxu0 %v129
    %1200 = vmatpush.msra.mxu0 %v125
    %1201 = vmatpush.msra.mxu0 %v121
    %1202 = vmatpush.msra.mxu0 %v117
    %1203 = vmatpush.msra.mxu0 %v113
    %1204 = vmatpush.msra.mxu0 %v109
    %1205 = vmatpush.msra.mxu0 %v105
    %1206 = vmatpush.msra.mxu0 %v101
    %1207 = vmatpush.msra.mxu0 %v97
    %1208 = vmatpush.msra.mxu0 %v93
    %1209 = vmatmul.f32.gmra.mxu0 %v861
    %v1210 = vpop.f32.mrf.mxu0
    %v1211 = vadd.f32 %v951, %v1210
    %1212 = vdwg.mxu0
    %1213 = vmatpush.msra.mxu0 %v217
    %1214 = vmatpush.msra.mxu0 %v213
    %1215 = vmatpush.msra.mxu0 %v209
    %1216 = vmatpush.msra.mxu0 %v205
    %1217 = vmatpush.msra.mxu0 %v201
    %1218 = vmatpush.msra.mxu0 %v197
    %1219 = vmatpush.msra.mxu0 %v193
    %1220 = vmatpush.msra.mxu0 %v189
    %1221 = vmatpush.msra.mxu0 %v185
    %1222 = vmatpush.msra.mxu0 %v181
    %1223 = vmatpush.msra.mxu0 %v177
    %1224 = vmatpush.msra.mxu0 %v173
    %1225 = vmatpush.msra.mxu0 %v169
    %1226 = vmatpush.msra.mxu0 %v165
    %1227 = vmatpush.msra.mxu0 %v161
    %1228 = vmatpush.msra.mxu0 %v157
    %1229 = vmatmul.f32.gmra.mxu0 %v862
    %v1230 = vpop.f32.mrf.mxu0
    %v1231 = vadd.f32 %v1211, %v1230
    %1232 = vdwg.mxu0
    %1233 = vmatpush.msra.mxu0 %v281
    %1234 = vmatpush.msra.mxu0 %v277
    %1235 = vmatpush.msra.mxu0 %v273
    %1236 = vmatpush.msra.mxu0 %v269
    %1237 = vmatpush.msra.mxu0 %v265
    %1238 = vmatpush.msra.mxu0 %v261
    %1239 = vmatpush.msra.mxu0 %v257
    %1240 = vmatpush.msra.mxu0 %v253
    %1241 = vmatpush.msra.mxu0 %v249
    %1242 = vmatpush.msra.mxu0 %v245
    %1243 = vmatpush.msra.mxu0 %v241
    %1244 = vmatpush.msra.mxu0 %v237
    %1245 = vmatpush.msra.mxu0 %v233
    %1246 = vmatpush.msra.mxu0 %v229
    %1247 = vmatpush.msra.mxu0 %v225
    %1248 = vmatpush.msra.mxu0 %v221
    %1249 = vmatmul.f32.gmra.mxu0 %v863
    %v1250 = vpop.f32.mrf.mxu0
    %v1251 = vadd.f32 %v1231, %v1250
    %1252 = vdwg.mxu0
    %1253 = vmatpush.msra.mxu0 %v345
    %1254 = vmatpush.msra.mxu0 %v341
    %1255 = vmatpush.msra.mxu0 %v337
    %1256 = vmatpush.msra.mxu0 %v333
    %1257 = vmatpush.msra.mxu0 %v329
    %1258 = vmatpush.msra.mxu0 %v325
    %1259 = vmatpush.msra.mxu0 %v321
    %1260 = vmatpush.msra.mxu0 %v317
    %1261 = vmatpush.msra.mxu0 %v313
    %1262 = vmatpush.msra.mxu0 %v309
    %1263 = vmatpush.msra.mxu0 %v305
    %1264 = vmatpush.msra.mxu0 %v301
    %1265 = vmatpush.msra.mxu0 %v297
    %1266 = vmatpush.msra.mxu0 %v293
    %1267 = vmatpush.msra.mxu0 %v289
    %1268 = vmatpush.msra.mxu0 %v285
    %1269 = vmatmul.f32.gmra.mxu0 %v864
    %v1270 = vpop.f32.mrf.mxu0
    %v1271 = vadd.f32 %v1251, %v1270
    %1272 = vdwg.mxu0
    %1273 = vmatpush.msra.mxu0 %v409
    %1274 = vmatpush.msra.mxu0 %v405
    %1275 = vmatpush.msra.mxu0 %v401
    %1276 = vmatpush.msra.mxu0 %v397
    %1277 = vmatpush.msra.mxu0 %v393
    %1278 = vmatpush.msra.mxu0 %v389
    %1279 = vmatpush.msra.mxu0 %v385
    %1280 = vmatpush.msra.mxu0 %v381
    %1281 = vmatpush.msra.mxu0 %v377
    %1282 = vmatpush.msra.mxu0 %v373
    %1283 = vmatpush.msra.mxu0 %v369
    %1284 = vmatpush.msra.mxu0 %v365
    %1285 = vmatpush.msra.mxu0 %v361
    %1286 = vmatpush.msra.mxu0 %v357
    %1287 = vmatpush.msra.mxu0 %v353
    %1288 = vmatpush.msra.mxu0 %v349
    %1289 = vmatmul.f32.gmra.mxu0 %v865
    %v1290 = vpop.f32.mrf.mxu0
    %v1291 = vadd.f32 %v1271, %v1290
    %1292 = vdwg.mxu0
    %1293 = vmatpush.msra.mxu0 %v473
    %1294 = vmatpush.msra.mxu0 %v469
    %1295 = vmatpush.msra.mxu0 %v465
    %1296 = vmatpush.msra.mxu0 %v461
    %1297 = vmatpush.msra.mxu0 %v457
    %1298 = vmatpush.msra.mxu0 %v453
    %1299 = vmatpush.msra.mxu0 %v449
    %1300 = vmatpush.msra.mxu0 %v445
    %1301 = vmatpush.msra.mxu0 %v441
    %1302 = vmatpush.msra.mxu0 %v437
    %1303 = vmatpush.msra.mxu0 %v433
    %1304 = vmatpush.msra.mxu0 %v429
    %1305 = vmatpush.msra.mxu0 %v425
    %1306 = vmatpush.msra.mxu0 %v421
    %1307 = vmatpush.msra.mxu0 %v417
    %1308 = vmatpush.msra.mxu0 %v413
    %1309 = vmatmul.f32.gmra.mxu0 %v866
    %v1310 = vpop.f32.mrf.mxu0
    %v1311 = vadd.f32 %v1291, %v1310
    %1312 = vdwg.mxu0
    %1313 = vmatpush.msra.mxu0 %v537
    %1314 = vmatpush.msra.mxu0 %v533
    %1315 = vmatpush.msra.mxu0 %v529
    %1316 = vmatpush.msra.mxu0 %v525
    %1317 = vmatpush.msra.mxu0 %v521
    %1318 = vmatpush.msra.mxu0 %v517
    %1319 = vmatpush.msra.mxu0 %v513
    %1320 = vmatpush.msra.mxu0 %v509
    %1321 = vmatpush.msra.mxu0 %v505
    %1322 = vmatpush.msra.mxu0 %v501
    %1323 = vmatpush.msra.mxu0 %v497
    %1324 = vmatpush.msra.mxu0 %v493
    %1325 = vmatpush.msra.mxu0 %v489
    %1326 = vmatpush.msra.mxu0 %v485
    %1327 = vmatpush.msra.mxu0 %v481
    %1328 = vmatpush.msra.mxu0 %v477
    %1329 = vmatmul.f32.gmra.mxu0 %v867
    %v1330 = vpop.f32.mrf.mxu0
    %v1331 = vadd.f32 %v1311, %v1330
    %1332 = vdwg.mxu0
    %1333 = vmatpush.msra.mxu0 %v601
    %1334 = vmatpush.msra.mxu0 %v597
    %1335 = vmatpush.msra.mxu0 %v593
    %1336 = vmatpush.msra.mxu0 %v589
    %1337 = vmatpush.msra.mxu0 %v585
    %1338 = vmatpush.msra.mxu0 %v581
    %1339 = vmatpush.msra.mxu0 %v577
    %1340 = vmatpush.msra.mxu0 %v573
    %1341 = vmatpush.msra.mxu0 %v569
    %1342 = vmatpush.msra.mxu0 %v565
    %1343 = vmatpush.msra.mxu0 %v561
    %1344 = vmatpush.msra.mxu0 %v557
    %1345 = vmatpush.msra.mxu0 %v553
    %1346 = vmatpush.msra.mxu0 %v549
    %1347 = vmatpush.msra.mxu0 %v545
    %1348 = vmatpush.msra.mxu0 %v541
    %1349 = vmatmul.f32.gmra.mxu0 %v868
    %v1350 = vpop.f32.mrf.mxu0
    %v1351 = vadd.f32 %v1331, %v1350
    %1352 = vdwg.mxu0
    %1353 = vmatpush.msra.mxu0 %v154
    %1354 = vmatpush.msra.mxu0 %v150
    %1355 = vmatpush.msra.mxu0 %v146
    %1356 = vmatpush.msra.mxu0 %v142
    %1357 = vmatpush.msra.mxu0 %v138
    %1358 = vmatpush.msra.mxu0 %v134
    %1359 = vmatpush.msra.mxu0 %v130
    %1360 = vmatpush.msra.mxu0 %v126
    %1361 = vmatpush.msra.mxu0 %v122
    %1362 = vmatpush.msra.mxu0 %v118
    %1363 = vmatpush.msra.mxu0 %v114
    %1364 = vmatpush.msra.mxu0 %v110
    %1365 = vmatpush.msra.mxu0 %v106
    %1366 = vmatpush.msra.mxu0 %v102
    %1367 = vmatpush.msra.mxu0 %v98
    %1368 = vmatpush.msra.mxu0 %v94
    %1369 = vmatmul.f32.gmra.mxu0 %v861
    %v1370 = vpop.f32.mrf.mxu0
    %v1371 = vadd.f32 %v1031, %v1370
    %1372 = vdwg.mxu0
    %1373 = vmatpush.msra.mxu0 %v218
    %1374 = vmatpush.msra.mxu0 %v214
    %1375 = vmatpush.msra.mxu0 %v210
    %1376 = vmatpush.msra.mxu0 %v206
    %1377 = vmatpush.msra.mxu0 %v202
    %1378 = vmatpush.msra.mxu0 %v198
    %1379 = vmatpush.msra.mxu0 %v194
    %1380 = vmatpush.msra.mxu0 %v190
    %1381 = vmatpush.msra.mxu0 %v186
    %1382 = vmatpush.msra.mxu0 %v182
    %1383 = vmatpush.msra.mxu0 %v178
    %1384 = vmatpush.msra.mxu0 %v174
    %1385 = vmatpush.msra.mxu0 %v170
    %1386 = vmatpush.msra.mxu0 %v166
    %1387 = vmatpush.msra.mxu0 %v162
    %1388 = vmatpush.msra.mxu0 %v158
    %1389 = vmatmul.f32.gmra.mxu0 %v862
    %v1390 = vpop.f32.mrf.mxu0
    %v1391 = vadd.f32 %v1371, %v1390
    %1392 = vdwg.mxu0
    %1393 = vmatpush.msra.mxu0 %v282
    %1394 = vmatpush.msra.mxu0 %v278
    %1395 = vmatpush.msra.mxu0 %v274
    %1396 = vmatpush.msra.mxu0 %v270
    %1397 = vmatpush.msra.mxu0 %v266
    %1398 = vmatpush.msra.mxu0 %v262
    %1399 = vmatpush.msra.mxu0 %v258
    %1400 = vmatpush.msra.mxu0 %v254
    %1401 = vmatpush.msra.mxu0 %v250
    %1402 = vmatpush.msra.mxu0 %v246
    %1403 = vmatpush.msra.mxu0 %v242
    %1404 = vmatpush.msra.mxu0 %v238
    %1405 = vmatpush.msra.mxu0 %v234
    %1406 = vmatpush.msra.mxu0 %v230
    %1407 = vmatpush.msra.mxu0 %v226
    %1408 = vmatpush.msra.mxu0 %v222
    %1409 = vmatmul.f32.gmra.mxu0 %v863
    %v1410 = vpop.f32.mrf.mxu0
    %v1411 = vadd.f32 %v1391, %v1410
    %1412 = vdwg.mxu0
    %1413 = vmatpush.msra.mxu0 %v346
    %1414 = vmatpush.msra.mxu0 %v342
    %1415 = vmatpush.msra.mxu0 %v338
    %1416 = vmatpush.msra.mxu0 %v334
    %1417 = vmatpush.msra.mxu0 %v330
    %1418 = vmatpush.msra.mxu0 %v326
    %1419 = vmatpush.msra.mxu0 %v322
    %1420 = vmatpush.msra.mxu0 %v318
    %1421 = vmatpush.msra.mxu0 %v314
    %1422 = vmatpush.msra.mxu0 %v310
    %1423 = vmatpush.msra.mxu0 %v306
    %1424 = vmatpush.msra.mxu0 %v302
    %1425 = vmatpush.msra.mxu0 %v298
    %1426 = vmatpush.msra.mxu0 %v294
    %1427 = vmatpush.msra.mxu0 %v290
    %1428 = vmatpush.msra.mxu0 %v286
    %1429 = vmatmul.f32.gmra.mxu0 %v864
    %v1430 = vpop.f32.mrf.mxu0
    %v1431 = vadd.f32 %v1411, %v1430
    %1432 = vdwg.mxu0
    %1433 = vmatpush.msra.mxu0 %v410
    %1434 = vmatpush.msra.mxu0 %v406
    %1435 = vmatpush.msra.mxu0 %v402
    %1436 = vmatpush.msra.mxu0 %v398
    %1437 = vmatpush.msra.mxu0 %v394
    %1438 = vmatpush.msra.mxu0 %v390
    %1439 = vmatpush.msra.mxu0 %v386
    %1440 = vmatpush.msra.mxu0 %v382
    %1441 = vmatpush.msra.mxu0 %v378
    %1442 = vmatpush.msra.mxu0 %v374
    %1443 = vmatpush.msra.mxu0 %v370
    %1444 = vmatpush.msra.mxu0 %v366
    %1445 = vmatpush.msra.mxu0 %v362
    %1446 = vmatpush.msra.mxu0 %v358
    %1447 = vmatpush.msra.mxu0 %v354
    %1448 = vmatpush.msra.mxu0 %v350
    %1449 = vmatmul.f32.gmra.mxu0 %v865
    %v1450 = vpop.f32.mrf.mxu0
    %v1451 = vadd.f32 %v1431, %v1450
    %1452 = vdwg.mxu0
    %1453 = vmatpush.msra.mxu0 %v474
    %1454 = vmatpush.msra.mxu0 %v470
    %1455 = vmatpush.msra.mxu0 %v466
    %1456 = vmatpush.msra.mxu0 %v462
    %1457 = vmatpush.msra.mxu0 %v458
    %1458 = vmatpush.msra.mxu0 %v454
    %1459 = vmatpush.msra.mxu0 %v450
    %1460 = vmatpush.msra.mxu0 %v446
    %1461 = vmatpush.msra.mxu0 %v442
    %1462 = vmatpush.msra.mxu0 %v438
    %1463 = vmatpush.msra.mxu0 %v434
    %1464 = vmatpush.msra.mxu0 %v430
    %1465 = vmatpush.msra.mxu0 %v426
    %1466 = vmatpush.msra.mxu0 %v422
    %1467 = vmatpush.msra.mxu0 %v418
    %1468 = vmatpush.msra.mxu0 %v414
    %1469 = vmatmul.f32.gmra.mxu0 %v866
    %v1470 = vpop.f32.mrf.mxu0
    %v1471 = vadd.f32 %v1451, %v1470
    %1472 = vdwg.mxu0
    %1473 = vmatpush.msra.mxu0 %v538
    %1474 = vmatpush.msra.mxu0 %v534
    %1475 = vmatpush.msra.mxu0 %v530
    %1476 = vmatpush.msra.mxu0 %v526
    %1477 = vmatpush.msra.mxu0 %v522
    %1478 = vmatpush.msra.mxu0 %v518
    %1479 = vmatpush.msra.mxu0 %v514
    %1480 = vmatpush.msra.mxu0 %v510
    %1481 = vmatpush.msra.mxu0 %v506
    %1482 = vmatpush.msra.mxu0 %v502
    %1483 = vmatpush.msra.mxu0 %v498
    %1484 = vmatpush.msra.mxu0 %v494
    %1485 = vmatpush.msra.mxu0 %v490
    %1486 = vmatpush.msra.mxu0 %v486
    %1487 = vmatpush.msra.mxu0 %v482
    %1488 = vmatpush.msra.mxu0 %v478
    %1489 = vmatmul.f32.gmra.mxu0 %v867
    %v1490 = vpop.f32.mrf.mxu0
    %v1491 = vadd.f32 %v1471, %v1490
    %1492 = vdwg.mxu0
    %1493 = vmatpush.msra.mxu0 %v602
    %1494 = vmatpush.msra.mxu0 %v598
    %1495 = vmatpush.msra.mxu0 %v594
    %1496 = vmatpush.msra.mxu0 %v590
    %1497 = vmatpush.msra.mxu0 %v586
    %1498 = vmatpush.msra.mxu0 %v582
    %1499 = vmatpush.msra.mxu0 %v578
    %1500 = vmatpush.msra.mxu0 %v574
    %1501 = vmatpush.msra.mxu0 %v570
    %1502 = vmatpush.msra.mxu0 %v566
    %1503 = vmatpush.msra.mxu0 %v562
    %1504 = vmatpush.msra.mxu0 %v558
    %1505 = vmatpush.msra.mxu0 %v554
    %1506 = vmatpush.msra.mxu0 %v550
    %1507 = vmatpush.msra.mxu0 %v546
    %1508 = vmatpush.msra.mxu0 %v542
    %1509 = vmatmul.f32.gmra.mxu0 %v868
    %v1510 = vpop.f32.mrf.mxu0
    %v1511 = vadd.f32 %v1491, %v1510
    %1512 = vdwg.mxu0
    %1513 = vmatpush.msra.mxu0 %v155
    %1514 = vmatpush.msra.mxu0 %v151
    %1515 = vmatpush.msra.mxu0 %v147
    %1516 = vmatpush.msra.mxu0 %v143
    %1517 = vmatpush.msra.mxu0 %v139
    %1518 = vmatpush.msra.mxu0 %v135
    %1519 = vmatpush.msra.mxu0 %v131
    %1520 = vmatpush.msra.mxu0 %v127
    %1521 = vmatpush.msra.mxu0 %v123
    %1522 = vmatpush.msra.mxu0 %v119
    %1523 = vmatpush.msra.mxu0 %v115
    %1524 = vmatpush.msra.mxu0 %v111
    %1525 = vmatpush.msra.mxu0 %v107
    %1526 = vmatpush.msra.mxu0 %v103
    %1527 = vmatpush.msra.mxu0 %v99
    %1528 = vmatpush.msra.mxu0 %v95
    %1529 = vmatmul.f32.gmra.mxu0 %v861
    %v1530 = vpop.f32.mrf.mxu0
    %v1531 = vadd.f32 %v1111, %v1530
    %1532 = vdwg.mxu0
    %1533 = vmatpush.msra.mxu0 %v219
    %1534 = vmatpush.msra.mxu0 %v215
    %1535 = vmatpush.msra.mxu0 %v211
    %1536 = vmatpush.msra.mxu0 %v207
    %1537 = vmatpush.msra.mxu0 %v203
    %1538 = vmatpush.msra.mxu0 %v199
    %1539 = vmatpush.msra.mxu0 %v195
    %1540 = vmatpush.msra.mxu0 %v191
    %1541 = vmatpush.msra.mxu0 %v187
    %1542 = vmatpush.msra.mxu0 %v183
    %1543 = vmatpush.msra.mxu0 %v179
    %1544 = vmatpush.msra.mxu0 %v175
    %1545 = vmatpush.msra.mxu0 %v171
    %1546 = vmatpush.msra.mxu0 %v167
    %1547 = vmatpush.msra.mxu0 %v163
    %1548 = vmatpush.msra.mxu0 %v159
    %1549 = vmatmul.f32.gmra.mxu0 %v862
    %v1550 = vpop.f32.mrf.mxu0
    %v1551 = vadd.f32 %v1531, %v1550
    %1552 = vdwg.mxu0
    %1553 = vmatpush.msra.mxu0 %v283
    %1554 = vmatpush.msra.mxu0 %v279
    %1555 = vmatpush.msra.mxu0 %v275
    %1556 = vmatpush.msra.mxu0 %v271
    %1557 = vmatpush.msra.mxu0 %v267
    %1558 = vmatpush.msra.mxu0 %v263
    %1559 = vmatpush.msra.mxu0 %v259
    %1560 = vmatpush.msra.mxu0 %v255
    %1561 = vmatpush.msra.mxu0 %v251
    %1562 = vmatpush.msra.mxu0 %v247
    %1563 = vmatpush.msra.mxu0 %v243
    %1564 = vmatpush.msra.mxu0 %v239
    %1565 = vmatpush.msra.mxu0 %v235
    %1566 = vmatpush.msra.mxu0 %v231
    %1567 = vmatpush.msra.mxu0 %v227
    %1568 = vmatpush.msra.mxu0 %v223
    %1569 = vmatmul.f32.gmra.mxu0 %v863
    %v1570 = vpop.f32.mrf.mxu0
    %v1571 = vadd.f32 %v1551, %v1570
    %1572 = vdwg.mxu0
    %1573 = vmatpush.msra.mxu0 %v347
    %1574 = vmatpush.msra.mxu0 %v343
    %1575 = vmatpush.msra.mxu0 %v339
    %1576 = vmatpush.msra.mxu0 %v335
    %1577 = vmatpush.msra.mxu0 %v331
    %1578 = vmatpush.msra.mxu0 %v327
    %1579 = vmatpush.msra.mxu0 %v323
    %1580 = vmatpush.msra.mxu0 %v319
    %1581 = vmatpush.msra.mxu0 %v315
    %1582 = vmatpush.msra.mxu0 %v311
    %1583 = vmatpush.msra.mxu0 %v307
    %1584 = vmatpush.msra.mxu0 %v303
    %1585 = vmatpush.msra.mxu0 %v299
    %1586 = vmatpush.msra.mxu0 %v295
    %1587 = vmatpush.msra.mxu0 %v291
    %1588 = vmatpush.msra.mxu0 %v287
    %1589 = vmatmul.f32.gmra.mxu0 %v864
    %v1590 = vpop.f32.mrf.mxu0
    %v1591 = vadd.f32 %v1571, %v1590
    %1592 = vdwg.mxu0
    %1593 = vmatpush.msra.mxu0 %v411
    %1594 = vmatpush.msra.mxu0 %v407
    %1595 = vmatpush.msra.mxu0 %v403
    %1596 = vmatpush.msra.mxu0 %v399
    %1597 = vmatpush.msra.mxu0 %v395
    %1598 = vmatpush.msra.mxu0 %v391
    %1599 = vmatpush.msra.mxu0 %v387
    %1600 = vmatpush.msra.mxu0 %v383
    %1601 = vmatpush.msra.mxu0 %v379
    %1602 = vmatpush.msra.mxu0 %v375
    %1603 = vmatpush.msra.mxu0 %v371
    %1604 = vmatpush.msra.mxu0 %v367
    %1605 = vmatpush.msra.mxu0 %v363
    %1606 = vmatpush.msra.mxu0 %v359
    %1607 = vmatpush.msra.mxu0 %v355
    %1608 = vmatpush.msra.mxu0 %v351
    %1609 = vmatmul.f32.gmra.mxu0 %v865
    %v1610 = vpop.f32.mrf.mxu0
    %v1611 = vadd.f32 %v1591, %v1610
    %1612 = vdwg.mxu0
    %1613 = vmatpush.msra.mxu0 %v475
    %1614 = vmatpush.msra.mxu0 %v471
    %1615 = vmatpush.msra.mxu0 %v467
    %1616 = vmatpush.msra.mxu0 %v463
    %1617 = vmatpush.msra.mxu0 %v459
    %1618 = vmatpush.msra.mxu0 %v455
    %1619 = vmatpush.msra.mxu0 %v451
    %1620 = vmatpush.msra.mxu0 %v447
    %1621 = vmatpush.msra.mxu0 %v443
    %1622 = vmatpush.msra.mxu0 %v439
    %1623 = vmatpush.msra.mxu0 %v435
    %1624 = vmatpush.msra.mxu0 %v431
    %1625 = vmatpush.msra.mxu0 %v427
    %1626 = vmatpush.msra.mxu0 %v423
    %1627 = vmatpush.msra.mxu0 %v419
    %1628 = vmatpush.msra.mxu0 %v415
    %1629 = vmatmul.f32.gmra.mxu0 %v866
    %v1630 = vpop.f32.mrf.mxu0
    %v1631 = vadd.f32 %v1611, %v1630
    %1632 = vdwg.mxu0
    %1633 = vmatpush.msra.mxu0 %v539
    %1634 = vmatpush.msra.mxu0 %v535
    %1635 = vmatpush.msra.mxu0 %v531
    %1636 = vmatpush.msra.mxu0 %v527
    %1637 = vmatpush.msra.mxu0 %v523
    %1638 = vmatpush.msra.mxu0 %v519
    %1639 = vmatpush.msra.mxu0 %v515
    %1640 = vmatpush.msra.mxu0 %v511
    %1641 = vmatpush.msra.mxu0 %v507
    %1642 = vmatpush.msra.mxu0 %v503
    %1643 = vmatpush.msra.mxu0 %v499
    %1644 = vmatpush.msra.mxu0 %v495
    %1645 = vmatpush.msra.mxu0 %v491
    %1646 = vmatpush.msra.mxu0 %v487
    %1647 = vmatpush.msra.mxu0 %v483
    %1648 = vmatpush.msra.mxu0 %v479
    %1649 = vmatmul.f32.gmra.mxu0 %v867
    %v1650 = vpop.f32.mrf.mxu0
    %v1651 = vadd.f32 %v1631, %v1650
    %1652 = vdwg.mxu0
    %1653 = vmatpush.msra.mxu0 %v603
    %1654 = vmatpush.msra.mxu0 %v599
    %1655 = vmatpush.msra.mxu0 %v595
    %1656 = vmatpush.msra.mxu0 %v591
    %1657 = vmatpush.msra.mxu0 %v587
    %1658 = vmatpush.msra.mxu0 %v583
    %1659 = vmatpush.msra.mxu0 %v579
    %1660 = vmatpush.msra.mxu0 %v575
    %1661 = vmatpush.msra.mxu0 %v571
    %1662 = vmatpush.msra.mxu0 %v567
    %1663 = vmatpush.msra.mxu0 %v563
    %1664 = vmatpush.msra.mxu0 %v559
    %1665 = vmatpush.msra.mxu0 %v555
    %1666 = vmatpush.msra.mxu0 %v551
    %1667 = vmatpush.msra.mxu0 %v547
    %1668 = vmatpush.msra.mxu0 %v543
    %1669 = vmatmul.f32.gmra.mxu0 %v868
    %v1670 = vpop.f32.mrf.mxu0
    %v1671 = vadd.f32 %v1651, %v1670
    %1672 = vdwg.mxu0
    %1673 = vmatpush.msra.mxu0 %v156
    %1674 = vmatpush.msra.mxu0 %v152
    %1675 = vmatpush.msra.mxu0 %v148
    %1676 = vmatpush.msra.mxu0 %v144
    %1677 = vmatpush.msra.mxu0 %v140
    %1678 = vmatpush.msra.mxu0 %v136
    %1679 = vmatpush.msra.mxu0 %v132
    %1680 = vmatpush.msra.mxu0 %v128
    %1681 = vmatpush.msra.mxu0 %v124
    %1682 = vmatpush.msra.mxu0 %v120
    %1683 = vmatpush.msra.mxu0 %v116
    %1684 = vmatpush.msra.mxu0 %v112
    %1685 = vmatpush.msra.mxu0 %v108
    %1686 = vmatpush.msra.mxu0 %v104
    %1687 = vmatpush.msra.mxu0 %v100
    %1688 = vmatpush.msra.mxu0 %v96
    %1689 = vmatmul.f32.gmra.mxu0 %v861
    %v1690 = vpop.f32.mrf.mxu0
    %v1691 = vadd.f32 %v1191, %v1690
    %1692 = vdwg.mxu0
    %1693 = vmatpush.msra.mxu0 %v220
    %1694 = vmatpush.msra.mxu0 %v216
    %1695 = vmatpush.msra.mxu0 %v212
    %1696 = vmatpush.msra.mxu0 %v208
    %1697 = vmatpush.msra.mxu0 %v204
    %1698 = vmatpush.msra.mxu0 %v200
    %1699 = vmatpush.msra.mxu0 %v196
    %1700 = vmatpush.msra.mxu0 %v192
    %1701 = vmatpush.msra.mxu0 %v188
    %1702 = vmatpush.msra.mxu0 %v184
    %1703 = vmatpush.msra.mxu0 %v180
    %1704 = vmatpush.msra.mxu0 %v176
    %1705 = vmatpush.msra.mxu0 %v172
    %1706 = vmatpush.msra.mxu0 %v168
    %1707 = vmatpush.msra.mxu0 %v164
    %1708 = vmatpush.msra.mxu0 %v160
    %1709 = vmatmul.f32.gmra.mxu0 %v862
    %v1710 = vpop.f32.mrf.mxu0
    %v1711 = vadd.f32 %v1691, %v1710
    %1712 = vdwg.mxu0
    %1713 = vmatpush.msra.mxu0 %v284
    %1714 = vmatpush.msra.mxu0 %v280
    %1715 = vmatpush.msra.mxu0 %v276
    %1716 = vmatpush.msra.mxu0 %v272
    %1717 = vmatpush.msra.mxu0 %v268
    %1718 = vmatpush.msra.mxu0 %v264
    %1719 = vmatpush.msra.mxu0 %v260
    %1720 = vmatpush.msra.mxu0 %v256
    %1721 = vmatpush.msra.mxu0 %v252
    %1722 = vmatpush.msra.mxu0 %v248
    %1723 = vmatpush.msra.mxu0 %v244
    %1724 = vmatpush.msra.mxu0 %v240
    %1725 = vmatpush.msra.mxu0 %v236
    %1726 = vmatpush.msra.mxu0 %v232
    %1727 = vmatpush.msra.mxu0 %v228
    %1728 = vmatpush.msra.mxu0 %v224
    %1729 = vmatmul.f32.gmra.mxu0 %v863
    %v1730 = vpop.f32.mrf.mxu0
    %v1731 = vadd.f32 %v1711, %v1730
    %1732 = vdwg.mxu0
    %1733 = vmatpush.msra.mxu0 %v348
    %1734 = vmatpush.msra.mxu0 %v344
    %1735 = vmatpush.msra.mxu0 %v340
    %1736 = vmatpush.msra.mxu0 %v336
    %1737 = vmatpush.msra.mxu0 %v332
    %1738 = vmatpush.msra.mxu0 %v328
    %1739 = vmatpush.msra.mxu0 %v324
    %1740 = vmatpush.msra.mxu0 %v320
    %1741 = vmatpush.msra.mxu0 %v316
    %1742 = vmatpush.msra.mxu0 %v312
    %1743 = vmatpush.msra.mxu0 %v308
    %1744 = vmatpush.msra.mxu0 %v304
    %1745 = vmatpush.msra.mxu0 %v300
    %1746 = vmatpush.msra.mxu0 %v296
    %1747 = vmatpush.msra.mxu0 %v292
    %1748 = vmatpush.msra.mxu0 %v288
    %1749 = vmatmul.f32.gmra.mxu0 %v864
    %v1750 = vpop.f32.mrf.mxu0
    %v1751 = vadd.f32 %v1731, %v1750
    %1752 = vdwg.mxu0
    %1753 = vmatpush.msra.mxu0 %v412
    %1754 = vmatpush.msra.mxu0 %v408
    %1755 = vmatpush.msra.mxu0 %v404
    %1756 = vmatpush.msra.mxu0 %v400
    %1757 = vmatpush.msra.mxu0 %v396
    %1758 = vmatpush.msra.mxu0 %v392
    %1759 = vmatpush.msra.mxu0 %v388
    %1760 = vmatpush.msra.mxu0 %v384
    %1761 = vmatpush.msra.mxu0 %v380
    %1762 = vmatpush.msra.mxu0 %v376
    %1763 = vmatpush.msra.mxu0 %v372
    %1764 = vmatpush.msra.mxu0 %v368
    %1765 = vmatpush.msra.mxu0 %v364
    %1766 = vmatpush.msra.mxu0 %v360
    %1767 = vmatpush.msra.mxu0 %v356
    %1768 = vmatpush.msra.mxu0 %v352
    %1769 = vmatmul.f32.gmra.mxu0 %v865
    %v1770 = vpop.f32.mrf.mxu0
    %v1771 = vadd.f32 %v1751, %v1770
    %1772 = vdwg.mxu0
    %1773 = vmatpush.msra.mxu0 %v476
    %1774 = vmatpush.msra.mxu0 %v472
    %1775 = vmatpush.msra.mxu0 %v468
    %1776 = vmatpush.msra.mxu0 %v464
    %1777 = vmatpush.msra.mxu0 %v460
    %1778 = vmatpush.msra.mxu0 %v456
    %1779 = vmatpush.msra.mxu0 %v452
    %1780 = vmatpush.msra.mxu0 %v448
    %1781 = vmatpush.msra.mxu0 %v444
    %1782 = vmatpush.msra.mxu0 %v440
    %1783 = vmatpush.msra.mxu0 %v436
    %1784 = vmatpush.msra.mxu0 %v432
    %1785 = vmatpush.msra.mxu0 %v428
    %1786 = vmatpush.msra.mxu0 %v424
    %1787 = vmatpush.msra.mxu0 %v420
    %1788 = vmatpush.msra.mxu0 %v416
    %1789 = vmatmul.f32.gmra.mxu0 %v866
    %v1790 = vpop.f32.mrf.mxu0
    %v1791 = vadd.f32 %v1771, %v1790
    %1792 = vdwg.mxu0
    %1793 = vmatpush.msra.mxu0 %v540
    %1794 = vmatpush.msra.mxu0 %v536
    %1795 = vmatpush.msra.mxu0 %v532
    %1796 = vmatpush.msra.mxu0 %v528
    %1797 = vmatpush.msra.mxu0 %v524
    %1798 = vmatpush.msra.mxu0 %v520
    %1799 = vmatpush.msra.mxu0 %v516
    %1800 = vmatpush.msra.mxu0 %v512
    %1801 = vmatpush.msra.mxu0 %v508
    %1802 = vmatpush.msra.mxu0 %v504
    %1803 = vmatpush.msra.mxu0 %v500
    %1804 = vmatpush.msra.mxu0 %v496
    %1805 = vmatpush.msra.mxu0 %v492
    %1806 = vmatpush.msra.mxu0 %v488
    %1807 = vmatpush.msra.mxu0 %v484
    %1808 = vmatpush.msra.mxu0 %v480
    %1809 = vmatmul.f32.gmra.mxu0 %v867
    %v1810 = vpop.f32.mrf.mxu0
    %v1811 = vadd.f32 %v1791, %v1810
    %1812 = vdwg.mxu0
    %1813 = vmatpush.msra.mxu0 %v604
    %1814 = vmatpush.msra.mxu0 %v600
    %1815 = vmatpush.msra.mxu0 %v596
    %1816 = vmatpush.msra.mxu0 %v592
    %1817 = vmatpush.msra.mxu0 %v588
    %1818 = vmatpush.msra.mxu0 %v584
    %1819 = vmatpush.msra.mxu0 %v580
    %1820 = vmatpush.msra.mxu0 %v576
    %1821 = vmatpush.msra.mxu0 %v572
    %1822 = vmatpush.msra.mxu0 %v568
    %1823 = vmatpush.msra.mxu0 %v564
    %1824 = vmatpush.msra.mxu0 %v560
    %1825 = vmatpush.msra.mxu0 %v556
    %1826 = vmatpush.msra.mxu0 %v552
    %1827 = vmatpush.msra.mxu0 %v548
    %1828 = vmatpush.msra.mxu0 %v544
    %1829 = vmatmul.f32.gmra.mxu0 %v868
    %v1830 = vpop.f32.mrf.mxu0
    %v1831 = vadd.f32 %v1811, %v1830
    %1832 = vdwg.mxu0
    %v1833 = vxor.u32 %v1351, 2147483648
    %v1834 = vxor.u32 %v1511, 2147483648
    %v1835 = vxor.u32 %v1671, 2147483648
    %v1836 = vxor.u32 %v1831, 2147483648
    %v1837 = vmul.f32 %v1833, 1.442695
    %v1838 = vpow.pop %v1837
    %v1839 = vmul.f32 %v1834, 1.442695
    %v1840 = vpow.pop %v1839
    %v1841 = vmul.f32 %v1835, 1.442695
    %v1842 = vpow.pop %v1841
    %v1843 = vmul.f32 %v1836, 1.442695
    %v1844 = vpow.pop %v1843
    %v1845 = vadd.f32 %v1838, 1.0
    %v1846 = vadd.f32 %v1840, 1.0
    %v1847 = vadd.f32 %v1842, 1.0
    %v1848 = vadd.f32 %v1844, 1.0
    %v1849 = vrcp.pop %v1845
    %v1850 = vmul.f32 %v1845, %v1849
    %v1851 = vsub.f32 1.0, %v1850
    %v1852 = vmul.f32 %v1849, %v1851
    %v1853 = vadd.f32 %v1849, %v1852
    %vm1854 = vweird.f32 %v1845
    %vm1855 = vweird.f32 %v1849
    %vm1856 = vmor %vm1854, %vm1855
    %v1857 = vsel %vm1856, %v1849, %v1853
    %v1858 = vand.u32 2147483647, %v1845
    %vm1859 = vcmp.eq.f32.partialorder %v1858, 8.507059e+37
    %v1860 = vand.u32 %v1845, 2147483648
    %v1861 = vor.u32 1.1754944e-38, %v1860
    %v1862 = vsel %vm1859, %v1861, %v1857
    %v1863 = vmul.f32 1.0, %v1862
    %v1864 = vrcp.pop %v1846
    %v1865 = vmul.f32 %v1846, %v1864
    %v1866 = vsub.f32 1.0, %v1865
    %v1867 = vmul.f32 %v1864, %v1866
    %v1868 = vadd.f32 %v1864, %v1867
    %vm1869 = vweird.f32 %v1846
    %vm1870 = vweird.f32 %v1864
    %vm1871 = vmor %vm1869, %vm1870
    %v1872 = vsel %vm1871, %v1864, %v1868
    %v1873 = vand.u32 2147483647, %v1846
    %vm1874 = vcmp.eq.f32.partialorder %v1873, 8.507059e+37
    %v1875 = vand.u32 %v1846, 2147483648
    %v1876 = vor.u32 1.1754944e-38, %v1875
    %v1877 = vsel %vm1874, %v1876, %v1872
    %v1878 = vmul.f32 1.0, %v1877
    %v1879 = vrcp.pop %v1847
    %v1880 = vmul.f32 %v1847, %v1879
    %v1881 = vsub.f32 1.0, %v1880
    %v1882 = vmul.f32 %v1879, %v1881
    %v1883 = vadd.f32 %v1879, %v1882
    %vm1884 = vweird.f32 %v1847
    %vm1885 = vweird.f32 %v1879
    %vm1886 = vmor %vm1884, %vm1885
    %v1887 = vsel %vm1886, %v1879, %v1883
    %v1888 = vand.u32 2147483647, %v1847
    %vm1889 = vcmp.eq.f32.partialorder %v1888, 8.507059e+37
    %v1890 = vand.u32 %v1847, 2147483648
    %v1891 = vor.u32 1.1754944e-38, %v1890
    %v1892 = vsel %vm1889, %v1891, %v1887
    %v1893 = vmul.f32 1.0, %v1892
    %v1894 = vrcp.pop %v1848
    %v1895 = vmul.f32 %v1848, %v1894
    %v1896 = vsub.f32 1.0, %v1895
    %v1897 = vmul.f32 %v1894, %v1896
    %v1898 = vadd.f32 %v1894, %v1897
    %vm1899 = vweird.f32 %v1848
    %vm1900 = vweird.f32 %v1894
    %vm1901 = vmor %vm1899, %vm1900
    %v1902 = vsel %vm1901, %v1894, %v1898
    %v1903 = vand.u32 2147483647, %v1848
    %vm1904 = vcmp.eq.f32.partialorder %v1903, 8.507059e+37
    %v1905 = vand.u32 %v1848, 2147483648
    %v1906 = vor.u32 1.1754944e-38, %v1905
    %v1907 = vsel %vm1904, %v1906, %v1902
    %v1908 = vmul.f32 1.0, %v1907
    %v1909 = vld [vmem:[#allocation7] sm:$0xff]
    %v1910 = vld [vmem:[#allocation7 + $0x8] sm:$0xff]
    %v1911 = vld [vmem:[#allocation7 + $0x10] sm:$0xff]
    %v1912 = vld [vmem:[#allocation7 + $0x18] sm:$0xff]
    %v1913 = vtanh.pop %v1909
    %v1914 = vtanh.pop %v1910
    %v1915 = vtanh.pop %v1911
    %v1916 = vtanh.pop %v1912
    %v1917 = vmul.f32 %v1863, %v1913
    %v1918 = vmul.f32 %v1878, %v1914
    %v1919 = vmul.f32 %v1893, %v1915
    %v1920 = vmul.f32 %v1908, %v1916
    %1921 = vst [vmem:[#allocation11] sm:$0xff] %v1917
    %1922 = vst [vmem:[#allocation11 + $0x8] sm:$0xff] %v1918
    %1923 = vst [vmem:[#allocation11 + $0x10] sm:$0xff] %v1919
    %1924 = vst [vmem:[#allocation11 + $0x18] sm:$0xff] %v1920
    // Predicated region
    $region42: #{tpu_custom_call.1} parent=1 // pred_check
      _
    $region43: #{tpu_custom_call.1} parent=1 // pred_check_branch
      %1926 = sbr.rel (0) target = $region45
    $region44: #{tpu_custom_call.1} parent=1 // pred_region
      %1928 = vsyncadd [#allocation4], 0
      %s1930 = sshll.u32 [#allocation11], 4
      %s1931 = int_to_ptr.vmem [resolvable:$true] %s1930
      %s1932 = sshll.u32 %s5, 4
      %s1933 = int_to_ptr.hbm [resolvable:$true] %s1932
      %1935 = dma.vmem_to_hbm [thread:$0]  %s1931, 512, %s1933, [#allocation4]
    $region45: #{tpu_custom_call.1} parent=1 // pred_fallthru
      _
    // Predicated region
    $region46: #{tpu_custom_call.1} parent=1 // pred_check
      _
    $region47: #{tpu_custom_call.1} parent=1 // pred_check_branch
      %1937 = sbr.rel (0) target = $region49
    $region48: #{tpu_custom_call.1} parent=1 // pred_region
      %1939 = dma.done [#allocation4], 512
    $region49: #{tpu_custom_call.1} parent=1 // pred_fallthru
      _
    %1940 = vsyncpa [#allocation3], 1
    %1941 = vsyncpa [#allocation6], 1
    %1942 = vsyncpa [#allocation9], 1
    %1943 = vsyncpa [#allocation4], 1

</llo_original>
